<compile_context>
chip_gen: v6e
topology: v6e:2x2x1
jax: 0.10.0
libtpu: 0.0.40
codegen_flags: <defaults>
</compile_context>

<pallas_src>
import jax
import jax.numpy as jnp
from jax.experimental import pallas as pl
from jax.experimental.pallas import tpu as pltpu

# ------------------------- model hyper-parameters ---------------------------
HIDDEN = 32        # hidden_size
OUTPUT = 16        # output_size
NUM_LAYERS = 2
MAX_LEN = 64       # max_length (encoder_outputs length / attn width)
BATCH = 2
LANES = 128        # lane width of the packed weight / output slabs

SELU_ALPHA = 1.6732632423543772
SELU_SCALE = 1.0507009873554805

# row offsets inside the packed weight+bias slab (weight offsets are multiples
# of 16 -> bf16 sublane-tile aligned)
ROW_LIN = 0                                    # (OUTPUT, H)        linear
ROW_ATTN = ROW_LIN + OUTPUT                    # (2H, MAX_LEN)      attn
ROW_COMB = ROW_ATTN + 2 * HIDDEN               # (2H, H)            attn_combine
ROW_GRU = ROW_COMB + 2 * HIDDEN                # NUM_LAYERS x (2H, 4H) GRU
ROW_OUT = ROW_GRU + 2 * HIDDEN * NUM_LAYERS    # (H, OUTPUT)        out
W_ROWS = ROW_OUT + HIDDEN                      # 304
ROW_BIAS = W_ROWS                              # bias rows start here
N_BIAS = 3 + NUM_LAYERS + 1                    # lin, attn, comb, gru*L, out
SLAB_ROWS = ROW_BIAS + 16                      # 320 (bias tile padded to 16)

# bias row indices (relative to ROW_BIAS)
B_LIN, B_ATTN, B_COMB, B_GRU0 = 0, 1, 2, 3
B_OUT = B_GRU0 + NUM_LAYERS


def _selu(x):
    return SELU_SCALE * jnp.where(x > 0, x, SELU_ALPHA * (jnp.exp(x) - 1.0))


def _bf(x):
    return x.astype(jnp.bfloat16)


# ------------------------------- Pallas kernel ------------------------------
def attn_decoder_kernel(inp_ref, h0_ref, enc_ref, wb_ref, out_ref, h_scr):
    """One decode step per grid iteration; hidden carried in VMEM scratch."""
    H = HIDDEN
    B = inp_ref.shape[1]
    t = pl.program_id(0)
    f32 = jnp.float32

    # ---- initialize the recurrent hidden state from the h0 input at t==0 ----
    @pl.when(t == 0)
    def _():
        h_scr[...] = h0_ref[...]

    # bias rows (one full bf16 tile), kept in f32 for the adds
    bias = wb_ref[ROW_BIAS:ROW_BIAS + 16, :].astype(f32)        # (16, 128)

    # 1) embedded = dropout(SELU(linear(inp)))  (dropout == identity, eval mode)
    x_in = inp_ref[0]                                           # (B, OUTPUT) f32
    emb_full = (
        jnp.dot(_bf(x_in), wb_ref[ROW_LIN:ROW_LIN + OUTPUT, :],
                preferred_element_type=f32)
        + bias[B_LIN:B_LIN + 1, :]
    )                                                           # (B, 128)
    emb = _selu(emb_full[:, :H])                                # (B, H)

    # 2) attention logits: split dots on the row-halves of the packed weight
    #    (avoids a lane-axis concat of [emb | hidden[-1]])
    h_top = h_scr[NUM_LAYERS - 1]                               # (B, H)
    logits_full = (
        jnp.dot(_bf(emb), wb_ref[ROW_ATTN:ROW_ATTN + H, :],
                preferred_element_type=f32)
        + jnp.dot(_bf(h_top), wb_ref[ROW_ATTN + H:ROW_ATTN + 2 * H, :],
                  preferred_element_type=f32)
        + bias[B_ATTN:B_ATTN + 1, :]
    )
    logits = logits_full[:, :MAX_LEN]                           # (B, L)
    m = jnp.max(logits, axis=-1, keepdims=True)
    e = jnp.exp(logits - m)
    # exact division: attention feeds back through the recurrence over T steps
    attn_w = e / jnp.sum(e, axis=-1, keepdims=True)

    # 3) bmm(attn_w (B,1,L), enc (B,L,H)) -> broadcast-mul + sublane reduce
    attn_applied = jnp.sum(attn_w[:, :, None] * enc_ref[...], axis=1)   # (B, H)

    # 4) attn_combine + SELU : split dots on [emb | attn_applied]
    comb_full = (
        jnp.dot(_bf(emb), wb_ref[ROW_COMB:ROW_COMB + H, :],
                preferred_element_type=f32)
        + jnp.dot(_bf(attn_applied), wb_ref[ROW_COMB + H:ROW_COMB + 2 * H, :],
                  preferred_element_type=f32)
        + bias[B_COMB:B_COMB + 1, :]
    )
    x = _selu(comb_full[:, :H])                                 # (B, H)

    # 5) multi-layer GRU, single time step, split dots per layer.
    #    packed weight columns: [rz (i+h summed) | gi_n | gh_n]
    new_h = []
    for l in range(NUM_LAYERS):
        h_prev = h_scr[l]                                       # (B, H) f32
        r0 = ROW_GRU + 2 * H * l
        g = (
            jnp.dot(_bf(x), wb_ref[r0:r0 + H, :],
                    preferred_element_type=f32)
            + jnp.dot(_bf(h_prev), wb_ref[r0 + H:r0 + 2 * H, :],
                      preferred_element_type=f32)
            + bias[B_GRU0 + l:B_GRU0 + l + 1, :]
        )                                                       # (B, 128)
        rz = jax.nn.sigmoid(g[:, :2 * H])
        r = rz[:, :H]
        z = rz[:, H:2 * H]
        n = jnp.tanh(g[:, 2 * H:3 * H] + r * g[:, 3 * H:4 * H])
        h_new = (1.0 - z) * n + z * h_prev
        h_scr[l] = h_new                                        # carry to step t+1
        new_h.append(h_new)
        x = h_new

    # 6) output projection, pack [out_t | h_0 | h_1 | pad] into a lane-dense
    #    (B, 128) slab -> single unmasked 128-lane store / one output DMA.
    out_full = (
        jnp.dot(_bf(x), wb_ref[ROW_OUT:ROW_OUT + H, :],
                preferred_element_type=f32)
        + bias[B_OUT:B_OUT + 1, :]
    )
    pad = jnp.zeros((B, LANES - OUTPUT - NUM_LAYERS * H), f32)
    out_ref[0] = jnp.concatenate([out_full[:, :OUTPUT]] + new_h + [pad], axis=-1)


# ------------------------ one-time parameter packing ------------------------
def init_params(key):
    ks = jax.random.split(key, 12)
    s = 0.1
    return {
        # PyTorch Linear convention: weight is (out_features, in_features)
        "lin_w": jax.random.normal(ks[0], (HIDDEN, OUTPUT), jnp.float32) * s,
        "lin_b": jax.random.normal(ks[1], (HIDDEN,), jnp.float32) * s,
        "attn_w": jax.random.normal(ks[2], (MAX_LEN, 2 * HIDDEN), jnp.float32) * s,
        "attn_b": jax.random.normal(ks[3], (MAX_LEN,), jnp.float32) * s,
        "comb_w": jax.random.normal(ks[4], (HIDDEN, 2 * HIDDEN), jnp.float32) * s,
        "comb_b": jax.random.normal(ks[5], (HIDDEN,), jnp.float32) * s,
        # GRU per layer: weight_ih (3H, H_in), weight_hh (3H, H), biases (3H,)
        "w_ih": jax.random.normal(ks[6], (NUM_LAYERS, 3 * HIDDEN, HIDDEN), jnp.float32) * s,
        "w_hh": jax.random.normal(ks[7], (NUM_LAYERS, 3 * HIDDEN, HIDDEN), jnp.float32) * s,
        "b_ih": jax.random.normal(ks[8], (NUM_LAYERS, 3 * HIDDEN), jnp.float32) * s,
        "b_hh": jax.random.normal(ks[9], (NUM_LAYERS, 3 * HIDDEN), jnp.float32) * s,
        "out_w": jax.random.normal(ks[10], (OUTPUT, HIDDEN), jnp.float32) * s,
        "out_b": jax.random.normal(ks[11], (OUTPUT,), jnp.float32) * s,
    }


def prepare_params(params):
    """One-time packing of every weight AND bias into a single lane-dense
    bf16 slab of shape (SLAB_ROWS, 128)."""
    H = HIDDEN

    def pad_cols(w):
        return jnp.pad(w.astype(jnp.float32), ((0, 0), (0, LANES - w.shape[1])))

    def pad_vec(v):
        return jnp.pad(v.astype(jnp.float32), (0, LANES - v.shape[0]))

    gru_w, gru_b = [], []
    for l in range(NUM_LAYERS):
        wi = params["w_ih"][l].T                        # (H, 3H) cols = [r|z|n]
        wh = params["w_hh"][l].T                        # (H, 3H)
        z32 = jnp.zeros((H, H), jnp.float32)
        top = jnp.concatenate([wi[:, :2 * H], wi[:, 2 * H:], z32], axis=1)   # (H, 4H)
        bot = jnp.concatenate([wh[:, :2 * H], z32, wh[:, 2 * H:]], axis=1)   # (H, 4H)
        gru_w.append(jnp.concatenate([top, bot], axis=0))                    # (2H, 4H)
        bi, bh = params["b_ih"][l], params["b_hh"][l]
        gru_b.append(jnp.concatenate([bi[:2 * H] + bh[:2 * H], bi[2 * H:], bh[2 * H:]]))

    w_rows = jnp.concatenate(
        [pad_cols(params["lin_w"].T),        # rows ROW_LIN
         pad_cols(params["attn_w"].T),       # rows ROW_ATTN
         pad_cols(params["comb_w"].T)]       # rows ROW_COMB
        + gru_w                              # rows ROW_GRU (4H == 128, no pad)
        + [pad_cols(params["out_w"].T)],     # rows ROW_OUT
        axis=0)
    assert w_rows.shape == (W_ROWS, LANES)

    b_rows = jnp.stack(
        [pad_vec(params["lin_b"]),
         pad_vec(params["attn_b"]),
         pad_vec(params["comb_b"])]
        + gru_b
        + [pad_vec(params["out_b"])],
        axis=0)                              # (N_BIAS, 128)
    assert b_rows.shape == (N_BIAS, LANES)

    pad_rows = jnp.zeros((SLAB_ROWS - W_ROWS - N_BIAS, LANES), jnp.float32)
    slab = jnp.concatenate([w_rows, b_rows, pad_rows], axis=0).astype(jnp.bfloat16)
    assert slab.shape == (SLAB_ROWS, LANES)
    return {"wb": slab}


# --------------------------------- wrappers ---------------------------------
def _forward_seq(prepared, inp_seq, hidden, encoder_outputs):
    """Fused multi-step decode (teacher-forced inputs).

    inp_seq: (B, T, OUTPUT), hidden: (NUM_LAYERS, B, HIDDEN),
    encoder_outputs: (B, MAX_LEN, HIDDEN).
    Returns (out (B, T, OUTPUT), final hidden (NUM_LAYERS, B, HIDDEN)).
    Each step is exactly one application of the PyTorch module's forward with
    the hidden state fed back."""
    B, T, _ = inp_seq.shape
    inp_t = jnp.transpose(inp_seq, (1, 0, 2))       # (T, B, OUTPUT)

    slab = pl.pallas_call(
        attn_decoder_kernel,
        out_shape=jax.ShapeDtypeStruct((T, B, LANES), jnp.float32),
        grid_spec=pltpu.PrefetchScalarGridSpec(
            num_scalar_prefetch=0,
            grid=(T,),
            in_specs=[
                # per-step input block
                pl.BlockSpec((1, B, OUTPUT), lambda t: (t, 0, 0)),
                # residents (constant index_map -> DMA'd once, kept in VMEM)
                pl.BlockSpec((NUM_LAYERS, B, HIDDEN), lambda t: (0, 0, 0)),
                pl.BlockSpec((B, MAX_LEN, HIDDEN), lambda t: (0, 0, 0)),
                pl.BlockSpec((SLAB_ROWS, LANES), lambda t: (0, 0)),
            ],
            out_specs=pl.BlockSpec((1, B, LANES), lambda t: (t, 0, 0)),
            scratch_shapes=[pltpu.VMEM((NUM_LAYERS, B, HIDDEN), jnp.float32)],
        ),
        compiler_params=pltpu.CompilerParams(
            dimension_semantics=("arbitrary",)),
    )(inp_t, hidden, encoder_outputs, prepared["wb"])

    out_seq = jnp.transpose(slab[:, :, :OUTPUT], (1, 0, 2))     # (B, T, OUTPUT)
    last = slab[T - 1]
    new_hidden = jnp.stack(
        [last[:, OUTPUT + l * HIDDEN:OUTPUT + (l + 1) * HIDDEN]
         for l in range(NUM_LAYERS)], axis=0)
    return out_seq, new_hidden


def _forward_step(prepared, inp, hidden, encoder_outputs):
    """Single decode step -- the PyTorch module's forward signature:
    inp (B, 1, OUTPUT) -> (out (B, 1, OUTPUT), hidden (L, B, H))."""
    return _forward_seq(prepared, inp, hidden, encoder_outputs)


attn_decoder_forward_seq = jax.jit(_forward_seq)
attn_decoder_forward = jax.jit(_forward_step)


# ----------------------- pure-JAX reference (PyTorch semantics) -------------
def reference_forward(params, inp, hidden, encoder_outputs):
    emb = _selu(inp @ params["lin_w"].T + params["lin_b"])      # (B,1,H)
    h_top = hidden[-1][:, None, :]                              # (B,1,H)
    attn_in = jnp.concatenate([emb, h_top], -1)                 # (B,1,2H)
    aw = jax.nn.softmax(attn_in @ params["attn_w"].T + params["attn_b"], axis=-1)
    applied = jnp.einsum("btl,blh->bth", aw, encoder_outputs)   # (B,1,H)
    comb = jnp.concatenate([emb, applied], -1) @ params["comb_w"].T + params["comb_b"]
    x = _selu(comb)[:, 0, :]                                    # (B,H)
    new_h = []
    for l in range(NUM_LAYERS):
        h_prev = hidden[l]
        gi = x @ params["w_ih"][l].T + params["b_ih"][l]
        gh = h_prev @ params["w_hh"][l].T + params["b_hh"][l]
        r = jax.nn.sigmoid(gi[:, :HIDDEN] + gh[:, :HIDDEN])
        z = jax.nn.sigmoid(gi[:, HIDDEN:2 * HIDDEN] + gh[:, HIDDEN:2 * HIDDEN])
        n = jnp.tanh(gi[:, 2 * HIDDEN:] + r * gh[:, 2 * HIDDEN:])
        h_new = (1.0 - z) * n + z * h_prev
        new_h.append(h_new)
        x = h_new
    out = x @ params["out_w"].T + params["out_b"]
    return out[:, None, :], jnp.stack(new_h)


def reference_seq(params, inp_seq, hidden, encoder_outputs):
    outs, h = [], hidden
    for t in range(inp_seq.shape[1]):
        o, h = reference_forward(params, inp_seq[:, t:t + 1, :], h, encoder_outputs)
        outs.append(o)
    return jnp.concatenate(outs, axis=1), h


if __name__ == "__main__":
    key = jax.random.PRNGKey(0)
    kp, k1, k2, k3 = jax.random.split(key, 4)
    params = init_params(kp)
    prepared = prepare_params(params)          # one-time weight/bias packing

    T = 4
    inp_seq = jax.random.normal(k1, (BATCH, T, OUTPUT), jnp.float32)
    hidden = jax.random.normal(k2, (NUM_LAYERS, BATCH, HIDDEN), jnp.float32)
    encoder_outputs = jax.random.normal(k3, (BATCH, MAX_LEN, HIDDEN), jnp.float32)

    # fused multi-step decode (time loop inside the kernel)
    out_seq, new_hidden = attn_decoder_forward_seq(prepared, inp_seq, hidden,
                                                   encoder_outputs)
    out_seq = jax.block_until_ready(out_seq)
    new_hidden = jax.block_until_ready(new_hidden)

    ref_out, ref_hidden = reference_seq(params, inp_seq, hidden, encoder_outputs)
    assert out_seq.shape == (BATCH, T, OUTPUT)
    assert new_hidden.shape == (NUM_LAYERS, BATCH, HIDDEN)
    # tolerance covers bf16 weight slab / bf16 MXU inputs over T recurrent steps
    assert jnp.allclose(out_seq, ref_out, rtol=3e-2, atol=3e-2)
    assert jnp.allclose(new_hidden, ref_hidden, rtol=3e-2, atol=3e-2)

    # single-step forward (the PyTorch module's signature) is the T=1 case
    out1, h1 = attn_decoder_forward(prepared, inp_seq[:, :1, :], hidden,
                                    encoder_outputs)
    out1 = jax.block_until_ready(out1)
    h1 = jax.block_until_ready(h1)
    ref1, refh1 = reference_forward(params, inp_seq[:, :1, :], hidden,
                                    encoder_outputs)
    assert out1.shape == (BATCH, 1, OUTPUT)
    assert jnp.allclose(out1, ref1, rtol=3e-2, atol=3e-2)
    assert jnp.allclose(h1, refh1, rtol=3e-2, atol=3e-2)

    print("KERNEL_OK")
</pallas_src>

<mosaic_0001>
module attributes {stable_mosaic.version = 11 : i64} {
  func.func @attn_decoder_kernel(%arg0: i32, %arg1: memref<1x2x16xf32, #tpu.memory_space<vmem>>, %arg2: memref<2x2x32xf32, #tpu.memory_space<vmem>>, %arg3: memref<2x64x32xf32, #tpu.memory_space<vmem>>, %arg4: memref<320x128xbf16, #tpu.memory_space<vmem>>, %arg5: memref<1x2x128xf32, #tpu.memory_space<vmem>>, %arg6: memref<2x2x32xf32, #tpu.memory_space<vmem>>) attributes {dimension_semantics = [#tpu.dimension_semantics<arbitrary>], iteration_bounds = array<i64: 4>, scalar_prefetch = 0 : i64, scratch_operands = 1 : i64, tpu.core_type = #tpu.core_type<tc>, window_params = [{transform_indices = @transform_0, window_bounds = array<i64: 1, 2, 16>}, {pipeline_mode = #tpu.pipeline_mode<synchronous>, transform_indices = @transform_1, window_bounds = array<i64: 2, 2, 32>}, {pipeline_mode = #tpu.pipeline_mode<synchronous>, transform_indices = @transform_2, window_bounds = array<i64: 2, 64, 32>}, {pipeline_mode = #tpu.pipeline_mode<synchronous>, transform_indices = @transform_3, window_bounds = array<i64: 320, 128>}, {transform_indices = @transform_4, window_bounds = array<i64: 1, 2, 128>}]} {
    %c0_i32 = arith.constant 0 : i32
    %0 = arith.cmpi eq, %arg0, %c0_i32 : i32
    %1 = arith.extui %0 : i1 to i32
    %c0_i32_0 = arith.constant 0 : i32
    %2 = arith.cmpi ne, %1, %c0_i32_0 : i32
    scf.if %2 {
      %c0_60 = arith.constant 0 : index
      %c0_61 = arith.constant 0 : index
      %c0_62 = arith.constant 0 : index
      %150 = vector.load %arg2[%c0_60, %c0_61, %c0_62] : memref<2x2x32xf32, #tpu.memory_space<vmem>>, vector<2x2x32xf32>
      %c0_63 = arith.constant 0 : index
      %c0_64 = arith.constant 0 : index
      %c0_65 = arith.constant 0 : index
      %151 = vector.load %arg6[%c0_63, %c0_64, %c0_65] : memref<2x2x32xf32, #tpu.memory_space<vmem>>, vector<2x2x32xf32>
      tpu.vector_store %arg6[%c0_63, %c0_64, %c0_65], %150 {strides = array<i32>} : memref<2x2x32xf32, #tpu.memory_space<vmem>>, vector<2x2x32xf32>,
    } else {
    }
    %c304 = arith.constant 304 : index
    %c0 = arith.constant 0 : index
    %3 = vector.load %arg4[%c304, %c0] : memref<320x128xbf16, #tpu.memory_space<vmem>>, vector<16x128xbf16>
    %4 = arith.extf %3 : vector<16x128xbf16> to vector<16x128xf32>
    %c0_1 = arith.constant 0 : index
    %c0_2 = arith.constant 0 : index
    %c0_3 = arith.constant 0 : index
    %5 = vector.load %arg1[%c0_1, %c0_2, %c0_3] : memref<1x2x16xf32, #tpu.memory_space<vmem>>, vector<1x2x16xf32>
    %6 = vector.shape_cast %5 : vector<1x2x16xf32> to vector<2x16xf32>
    %7 = arith.truncf %6 : vector<2x16xf32> to vector<2x16xbf16>
    %c0_4 = arith.constant 0 : index
    %c0_5 = arith.constant 0 : index
    %8 = vector.load %arg4[%c0_4, %c0_5] : memref<320x128xbf16, #tpu.memory_space<vmem>>, vector<16x128xbf16>
    %cst = arith.constant dense<0.000000e+00> : vector<2x128xf32>
    %9 = tpu.matmul %7, %8, %cst {dimension_numbers = #tpu.dot_dimension_numbers<[1], [0], [0], [1], [0, 0, 1, 1], [], []>} : vector<2x16xbf16>, vector<16x128xbf16>, vector<2x128xf32> -> vector<2x128xf32>
    %10 = vector.extract_strided_slice %4 {offsets = [0, 0], sizes = [1, 128], strides = [1, 1]} : vector<16x128xf32> to vector<1x128xf32>
    %11 = vector.broadcast %10 : vector<1x128xf32> to vector<2x128xf32>
    %12 = arith.addf %9, %11 : vector<2x128xf32>
    %13 = vector.extract_strided_slice %12 {offsets = [0, 0], sizes = [2, 32], strides = [1, 1]} : vector<2x128xf32> to vector<2x32xf32>
    %cst_6 = arith.constant 0.000000e+00 : f32
    %14 = vector.broadcast %cst_6 : f32 to vector<2x32xf32>
    %15 = arith.cmpf ogt, %13, %14 : vector<2x32xf32>
    %16 = math.exp %13 : vector<2x32xf32>
    %cst_7 = arith.constant 1.000000e+00 : f32
    %17 = vector.broadcast %cst_7 : f32 to vector<2x32xf32>
    %18 = arith.subf %16, %17 : vector<2x32xf32>
    %cst_8 = arith.constant 1.67326319 : f32
    %19 = vector.broadcast %cst_8 : f32 to vector<2x32xf32>
    %20 = arith.mulf %19, %18 : vector<2x32xf32>
    %21 = arith.select %15, %13, %20 : vector<2x32xi1>, vector<2x32xf32>
    %cst_9 = arith.constant 1.05070102 : f32
    %22 = vector.broadcast %cst_9 : f32 to vector<2x32xf32>
    %23 = arith.mulf %22, %21 : vector<2x32xf32>
    %c1 = arith.constant 1 : index
    %c0_10 = arith.constant 0 : index
    %c0_11 = arith.constant 0 : index
    %24 = vector.load %arg6[%c1, %c0_10, %c0_11] : memref<2x2x32xf32, #tpu.memory_space<vmem>>, vector<1x2x32xf32>
    %25 = vector.shape_cast %24 : vector<1x2x32xf32> to vector<2x32xf32>
    %26 = arith.truncf %23 : vector<2x32xf32> to vector<2x32xbf16>
    %c16 = arith.constant 16 : index
    %c0_12 = arith.constant 0 : index
    %27 = vector.load %arg4[%c16, %c0_12] : memref<320x128xbf16, #tpu.memory_space<vmem>>, vector<32x128xbf16>
    %cst_13 = arith.constant dense<0.000000e+00> : vector<2x128xf32>
    %28 = tpu.matmul %26, %27, %cst_13 {dimension_numbers = #tpu.dot_dimension_numbers<[1], [0], [0], [1], [0, 0, 1, 1], [], []>} : vector<2x32xbf16>, vector<32x128xbf16>, vector<2x128xf32> -> vector<2x128xf32>
    %29 = arith.truncf %25 : vector<2x32xf32> to vector<2x32xbf16>
    %c48 = arith.constant 48 : index
    %c0_14 = arith.constant 0 : index
    %30 = vector.load %arg4[%c48, %c0_14] : memref<320x128xbf16, #tpu.memory_space<vmem>>, vector<32x128xbf16>
    %cst_15 = arith.constant dense<0.000000e+00> : vector<2x128xf32>
    %31 = tpu.matmul %29, %30, %cst_15 {dimension_numbers = #tpu.dot_dimension_numbers<[1], [0], [0], [1], [0, 0, 1, 1], [], []>} : vector<2x32xbf16>, vector<32x128xbf16>, vector<2x128xf32> -> vector<2x128xf32>
    %32 = arith.addf %28, %31 : vector<2x128xf32>
    %33 = vector.extract_strided_slice %4 {offsets = [1, 0], sizes = [1, 128], strides = [1, 1]} : vector<16x128xf32> to vector<1x128xf32>
    %34 = vector.broadcast %33 : vector<1x128xf32> to vector<2x128xf32>
    %35 = arith.addf %32, %34 : vector<2x128xf32>
    %36 = vector.extract_strided_slice %35 {offsets = [0, 0], sizes = [2, 64], strides = [1, 1]} : vector<2x128xf32> to vector<2x64xf32>
    %cst_16 = arith.constant dense<0xFF800000> : vector<2xf32>
    %37 = vector.multi_reduction <maximumf>, %36, %cst_16 [1] : vector<2x64xf32> to vector<2xf32>
    %38 = vector.shape_cast %37 : vector<2xf32> to vector<2x1xf32>
    %39 = vector.broadcast %38 : vector<2x1xf32> to vector<2x64xf32>
    %40 = arith.subf %36, %39 : vector<2x64xf32>
    %41 = math.exp %40 : vector<2x64xf32>
    %cst_17 = arith.constant dense<0.000000e+00> : vector<2xf32>
    %42 = vector.multi_reduction <add>, %41, %cst_17 [1] : vector<2x64xf32> to vector<2xf32>
    %43 = vector.shape_cast %42 : vector<2xf32> to vector<2x1xf32>
    %44 = vector.broadcast %43 : vector<2x1xf32> to vector<2x64xf32>
    %45 = arith.divf %41, %44 : vector<2x64xf32>
    %46 = vector.shape_cast %45 : vector<2x64xf32> to vector<2x64x1xf32>
    %c0_18 = arith.constant 0 : index
    %c0_19 = arith.constant 0 : index
    %c0_20 = arith.constant 0 : index
    %47 = vector.load %arg3[%c0_18, %c0_19, %c0_20] : memref<2x64x32xf32, #tpu.memory_space<vmem>>, vector<2x64x32xf32>
    %48 = vector.broadcast %46 : vector<2x64x1xf32> to vector<2x64x32xf32>
    %49 = arith.mulf %48, %47 : vector<2x64x32xf32>
    %cst_21 = arith.constant dense<0.000000e+00> : vector<2x32xf32>
    %50 = vector.multi_reduction <add>, %49, %cst_21 [1] : vector<2x64x32xf32> to vector<2x32xf32>
    %51 = arith.truncf %23 : vector<2x32xf32> to vector<2x32xbf16>
    %c80 = arith.constant 80 : index
    %c0_22 = arith.constant 0 : index
    %52 = vector.load %arg4[%c80, %c0_22] : memref<320x128xbf16, #tpu.memory_space<vmem>>, vector<32x128xbf16>
    %cst_23 = arith.constant dense<0.000000e+00> : vector<2x128xf32>
    %53 = tpu.matmul %51, %52, %cst_23 {dimension_numbers = #tpu.dot_dimension_numbers<[1], [0], [0], [1], [0, 0, 1, 1], [], []>} : vector<2x32xbf16>, vector<32x128xbf16>, vector<2x128xf32> -> vector<2x128xf32>
    %54 = arith.truncf %50 : vector<2x32xf32> to vector<2x32xbf16>
    %c112 = arith.constant 112 : index
    %c0_24 = arith.constant 0 : index
    %55 = vector.load %arg4[%c112, %c0_24] : memref<320x128xbf16, #tpu.memory_space<vmem>>, vector<32x128xbf16>
    %cst_25 = arith.constant dense<0.000000e+00> : vector<2x128xf32>
    %56 = tpu.matmul %54, %55, %cst_25 {dimension_numbers = #tpu.dot_dimension_numbers<[1], [0], [0], [1], [0, 0, 1, 1], [], []>} : vector<2x32xbf16>, vector<32x128xbf16>, vector<2x128xf32> -> vector<2x128xf32>
    %57 = arith.addf %53, %56 : vector<2x128xf32>
    %58 = vector.extract_strided_slice %4 {offsets = [2, 0], sizes = [1, 128], strides = [1, 1]} : vector<16x128xf32> to vector<1x128xf32>
    %59 = vector.broadcast %58 : vector<1x128xf32> to vector<2x128xf32>
    %60 = arith.addf %57, %59 : vector<2x128xf32>
    %61 = vector.extract_strided_slice %60 {offsets = [0, 0], sizes = [2, 32], strides = [1, 1]} : vector<2x128xf32> to vector<2x32xf32>
    %cst_26 = arith.constant 0.000000e+00 : f32
    %62 = vector.broadcast %cst_26 : f32 to vector<2x32xf32>
    %63 = arith.cmpf ogt, %61, %62 : vector<2x32xf32>
    %64 = math.exp %61 : vector<2x32xf32>
    %cst_27 = arith.constant 1.000000e+00 : f32
    %65 = vector.broadcast %cst_27 : f32 to vector<2x32xf32>
    %66 = arith.subf %64, %65 : vector<2x32xf32>
    %cst_28 = arith.constant 1.67326319 : f32
    %67 = vector.broadcast %cst_28 : f32 to vector<2x32xf32>
    %68 = arith.mulf %67, %66 : vector<2x32xf32>
    %69 = arith.select %63, %61, %68 : vector<2x32xi1>, vector<2x32xf32>
    %cst_29 = arith.constant 1.05070102 : f32
    %70 = vector.broadcast %cst_29 : f32 to vector<2x32xf32>
    %71 = arith.mulf %70, %69 : vector<2x32xf32>
    %c0_30 = arith.constant 0 : index
    %c0_31 = arith.constant 0 : index
    %c0_32 = arith.constant 0 : index
    %72 = vector.load %arg6[%c0_30, %c0_31, %c0_32] : memref<2x2x32xf32, #tpu.memory_space<vmem>>, vector<1x2x32xf32>
    %73 = vector.shape_cast %72 : vector<1x2x32xf32> to vector<2x32xf32>
    %74 = arith.truncf %71 : vector<2x32xf32> to vector<2x32xbf16>
    %c144 = arith.constant 144 : index
    %c0_33 = arith.constant 0 : index
    %75 = vector.load %arg4[%c144, %c0_33] : memref<320x128xbf16, #tpu.memory_space<vmem>>, vector<32x128xbf16>
    %cst_34 = arith.constant dense<0.000000e+00> : vector<2x128xf32>
    %76 = tpu.matmul %74, %75, %cst_34 {dimension_numbers = #tpu.dot_dimension_numbers<[1], [0], [0], [1], [0, 0, 1, 1], [], []>} : vector<2x32xbf16>, vector<32x128xbf16>, vector<2x128xf32> -> vector<2x128xf32>
    %77 = arith.truncf %73 : vector<2x32xf32> to vector<2x32xbf16>
    %c176 = arith.constant 176 : index
    %c0_35 = arith.constant 0 : index
    %78 = vector.load %arg4[%c176, %c0_35] : memref<320x128xbf16, #tpu.memory_space<vmem>>, vector<32x128xbf16>
    %cst_36 = arith.constant dense<0.000000e+00> : vector<2x128xf32>
    %79 = tpu.matmul %77, %78, %cst_36 {dimension_numbers = #tpu.dot_dimension_numbers<[1], [0], [0], [1], [0, 0, 1, 1], [], []>} : vector<2x32xbf16>, vector<32x128xbf16>, vector<2x128xf32> -> vector<2x128xf32>
    %80 = arith.addf %76, %79 : vector<2x128xf32>
    %81 = vector.extract_strided_slice %4 {offsets = [3, 0], sizes = [1, 128], strides = [1, 1]} : vector<16x128xf32> to vector<1x128xf32>
    %82 = vector.broadcast %81 : vector<1x128xf32> to vector<2x128xf32>
    %83 = arith.addf %80, %82 : vector<2x128xf32>
    %84 = vector.extract_strided_slice %83 {offsets = [0, 0], sizes = [2, 64], strides = [1, 1]} : vector<2x128xf32> to vector<2x64xf32>
    %85 = arith.negf %84 : vector<2x64xf32>
    %86 = math.exp %85 : vector<2x64xf32>
    %cst_37 = arith.constant 1.000000e+00 : f32
    %87 = vector.broadcast %cst_37 : f32 to vector<2x64xf32>
    %88 = arith.addf %87, %86 : vector<2x64xf32>
    %89 = arith.divf %87, %88 : vector<2x64xf32>
    %90 = vector.extract_strided_slice %89 {offsets = [0, 0], sizes = [2, 32], strides = [1, 1]} : vector<2x64xf32> to vector<2x32xf32>
    %91 = vector.extract_strided_slice %89 {offsets = [0, 32], sizes = [2, 32], strides = [1, 1]} : vector<2x64xf32> to vector<2x32xf32>
    %92 = vector.extract_strided_slice %83 {offsets = [0, 64], sizes = [2, 32], strides = [1, 1]} : vector<2x128xf32> to vector<2x32xf32>
    %93 = vector.extract_strided_slice %83 {offsets = [0, 96], sizes = [2, 32], strides = [1, 1]} : vector<2x128xf32> to vector<2x32xf32>
    %94 = arith.mulf %90, %93 : vector<2x32xf32>
    %95 = arith.addf %92, %94 : vector<2x32xf32>
    %96 = math.tanh %95 : vector<2x32xf32>
    %cst_38 = arith.constant 1.000000e+00 : f32
    %97 = vector.broadcast %cst_38 : f32 to vector<2x32xf32>
    %98 = arith.subf %97, %91 : vector<2x32xf32>
    %99 = arith.mulf %98, %96 : vector<2x32xf32>
    %100 = arith.mulf %91, %73 : vector<2x32xf32>
    %101 = arith.addf %99, %100 : vector<2x32xf32>
    %c0_39 = arith.constant 0 : index
    %c0_40 = arith.constant 0 : index
    %c0_41 = arith.constant 0 : index
    %102 = vector.load %arg6[%c0_39, %c0_40, %c0_41] : memref<2x2x32xf32, #tpu.memory_space<vmem>>, vector<1x2x32xf32>
    %103 = vector.shape_cast %102 : vector<1x2x32xf32> to vector<2x32xf32>
    %104 = vector.shape_cast %101 : vector<2x32xf32> to vector<1x2x32xf32>
    tpu.vector_store %arg6[%c0_39, %c0_40, %c0_41], %104 {strides = array<i32>} : memref<2x2x32xf32, #tpu.memory_space<vmem>>, vector<1x2x32xf32>,
    %c1_42 = arith.constant 1 : index
    %c0_43 = arith.constant 0 : index
    %c0_44 = arith.constant 0 : index
    %105 = vector.load %arg6[%c1_42, %c0_43, %c0_44] : memref<2x2x32xf32, #tpu.memory_space<vmem>>, vector<1x2x32xf32>
    %106 = vector.shape_cast %105 : vector<1x2x32xf32> to vector<2x32xf32>
    %107 = arith.truncf %101 : vector<2x32xf32> to vector<2x32xbf16>
    %c208 = arith.constant 208 : index
    %c0_45 = arith.constant 0 : index
    %108 = vector.load %arg4[%c208, %c0_45] : memref<320x128xbf16, #tpu.memory_space<vmem>>, vector<32x128xbf16>
    %cst_46 = arith.constant dense<0.000000e+00> : vector<2x128xf32>
    %109 = tpu.matmul %107, %108, %cst_46 {dimension_numbers = #tpu.dot_dimension_numbers<[1], [0], [0], [1], [0, 0, 1, 1], [], []>} : vector<2x32xbf16>, vector<32x128xbf16>, vector<2x128xf32> -> vector<2x128xf32>
    %110 = arith.truncf %106 : vector<2x32xf32> to vector<2x32xbf16>
    %c240 = arith.constant 240 : index
    %c0_47 = arith.constant 0 : index
    %111 = vector.load %arg4[%c240, %c0_47] : memref<320x128xbf16, #tpu.memory_space<vmem>>, vector<32x128xbf16>
    %cst_48 = arith.constant dense<0.000000e+00> : vector<2x128xf32>
    %112 = tpu.matmul %110, %111, %cst_48 {dimension_numbers = #tpu.dot_dimension_numbers<[1], [0], [0], [1], [0, 0, 1, 1], [], []>} : vector<2x32xbf16>, vector<32x128xbf16>, vector<2x128xf32> -> vector<2x128xf32>
    %113 = arith.addf %109, %112 : vector<2x128xf32>
    %114 = vector.extract_strided_slice %4 {offsets = [4, 0], sizes = [1, 128], strides = [1, 1]} : vector<16x128xf32> to vector<1x128xf32>
    %115 = vector.broadcast %114 : vector<1x128xf32> to vector<2x128xf32>
    %116 = arith.addf %113, %115 : vector<2x128xf32>
    %117 = vector.extract_strided_slice %116 {offsets = [0, 0], sizes = [2, 64], strides = [1, 1]} : vector<2x128xf32> to vector<2x64xf32>
    %118 = arith.negf %117 : vector<2x64xf32>
    %119 = math.exp %118 : vector<2x64xf32>
    %cst_49 = arith.constant 1.000000e+00 : f32
    %120 = vector.broadcast %cst_49 : f32 to vector<2x64xf32>
    %121 = arith.addf %120, %119 : vector<2x64xf32>
    %122 = arith.divf %120, %121 : vector<2x64xf32>
    %123 = vector.extract_strided_slice %122 {offsets = [0, 0], sizes = [2, 32], strides = [1, 1]} : vector<2x64xf32> to vector<2x32xf32>
    %124 = vector.extract_strided_slice %122 {offsets = [0, 32], sizes = [2, 32], strides = [1, 1]} : vector<2x64xf32> to vector<2x32xf32>
    %125 = vector.extract_strided_slice %116 {offsets = [0, 64], sizes = [2, 32], strides = [1, 1]} : vector<2x128xf32> to vector<2x32xf32>
    %126 = vector.extract_strided_slice %116 {offsets = [0, 96], sizes = [2, 32], strides = [1, 1]} : vector<2x128xf32> to vector<2x32xf32>
    %127 = arith.mulf %123, %126 : vector<2x32xf32>
    %128 = arith.addf %125, %127 : vector<2x32xf32>
    %129 = math.tanh %128 : vector<2x32xf32>
    %cst_50 = arith.constant 1.000000e+00 : f32
    %130 = vector.broadcast %cst_50 : f32 to vector<2x32xf32>
    %131 = arith.subf %130, %124 : vector<2x32xf32>
    %132 = arith.mulf %131, %129 : vector<2x32xf32>
    %133 = arith.mulf %124, %106 : vector<2x32xf32>
    %134 = arith.addf %132, %133 : vector<2x32xf32>
    %c1_51 = arith.constant 1 : index
    %c0_52 = arith.constant 0 : index
    %c0_53 = arith.constant 0 : index
    %135 = vector.load %arg6[%c1_51, %c0_52, %c0_53] : memref<2x2x32xf32, #tpu.memory_space<vmem>>, vector<1x2x32xf32>
    %136 = vector.shape_cast %135 : vector<1x2x32xf32> to vector<2x32xf32>
    %137 = vector.shape_cast %134 : vector<2x32xf32> to vector<1x2x32xf32>
    tpu.vector_store %arg6[%c1_51, %c0_52, %c0_53], %137 {strides = array<i32>} : memref<2x2x32xf32, #tpu.memory_space<vmem>>, vector<1x2x32xf32>,
    %138 = arith.truncf %134 : vector<2x32xf32> to vector<2x32xbf16>
    %c272 = arith.constant 272 : index
    %c0_54 = arith.constant 0 : index
    %139 = vector.load %arg4[%c272, %c0_54] : memref<320x128xbf16, #tpu.memory_space<vmem>>, vector<32x128xbf16>
    %cst_55 = arith.constant dense<0.000000e+00> : vector<2x128xf32>
    %140 = tpu.matmul %138, %139, %cst_55 {dimension_numbers = #tpu.dot_dimension_numbers<[1], [0], [0], [1], [0, 0, 1, 1], [], []>} : vector<2x32xbf16>, vector<32x128xbf16>, vector<2x128xf32> -> vector<2x128xf32>
    %141 = vector.extract_strided_slice %4 {offsets = [5, 0], sizes = [1, 128], strides = [1, 1]} : vector<16x128xf32> to vector<1x128xf32>
    %142 = vector.broadcast %141 : vector<1x128xf32> to vector<2x128xf32>
    %143 = arith.addf %140, %142 : vector<2x128xf32>
    %cst_56 = arith.constant 0.000000e+00 : f32
    %144 = vector.broadcast %cst_56 : f32 to vector<2x48xf32>
    %145 = vector.extract_strided_slice %143 {offsets = [0, 0], sizes = [2, 16], strides = [1, 1]} : vector<2x128xf32> to vector<2x16xf32>
    %146 = tpu.concatenate %145, %101, %134, %144 in 1 : vector<2x16xf32>, vector<2x32xf32>, vector<2x32xf32>, vector<2x48xf32> -> vector<2x128xf32>
    %c0_57 = arith.constant 0 : index
    %c0_58 = arith.constant 0 : index
    %c0_59 = arith.constant 0 : index
    %147 = vector.load %arg5[%c0_57, %c0_58, %c0_59] : memref<1x2x128xf32, #tpu.memory_space<vmem>>, vector<1x2x128xf32>
    %148 = vector.shape_cast %147 : vector<1x2x128xf32> to vector<2x128xf32>
    %149 = vector.shape_cast %146 : vector<2x128xf32> to vector<1x2x128xf32>
    tpu.vector_store %arg5[%c0_57, %c0_58, %c0_59], %149 {strides = array<i32>} : memref<1x2x128xf32, #tpu.memory_space<vmem>>, vector<1x2x128xf32>,
    return
  }
  func.func @transform_0(%arg0: i32) -> (i32, i32, i32) {
    %c0_i32 = arith.constant 0 : i32
    %c0_i32_0 = arith.constant 0 : i32
    %c0_i32_1 = arith.constant 0 : i32
    return %arg0, %c0_i32, %c0_i32_0 : i32, i32, i32
  }
  func.func @transform_1(%arg0: i32) -> (i32, i32, i32) {
    %c0_i32 = arith.constant 0 : i32
    %c0_i32_0 = arith.constant 0 : i32
    %c0_i32_1 = arith.constant 0 : i32
    %c0_i32_2 = arith.constant 0 : i32
    return %c0_i32, %c0_i32_0, %c0_i32_1 : i32, i32, i32
  }
  func.func @transform_2(%arg0: i32) -> (i32, i32, i32) {
    %c0_i32 = arith.constant 0 : i32
    %c0_i32_0 = arith.constant 0 : i32
    %c0_i32_1 = arith.constant 0 : i32
    %c0_i32_2 = arith.constant 0 : i32
    return %c0_i32, %c0_i32_0, %c0_i32_1 : i32, i32, i32
  }
  func.func @transform_3(%arg0: i32) -> (i32, i32) {
    %c0_i32 = arith.constant 0 : i32
    %c0_i32_0 = arith.constant 0 : i32
    %c0_i32_1 = arith.constant 0 : i32
    return %c0_i32, %c0_i32_0 : i32, i32
  }
  func.func @transform_4(%arg0: i32) -> (i32, i32, i32) {
    %c0_i32 = arith.constant 0 : i32
    %c0_i32_0 = arith.constant 0 : i32
    %c0_i32_1 = arith.constant 0 : i32
    return %arg0, %c0_i32, %c0_i32_0 : i32, i32, i32
  }
}

</mosaic_0001>

<llo_original>
// kernel: _forward_seq.1
$region0: #{_forward_seq.1}
  #allocation0 [shape = 'u32[]', space=smem, size = 0x4, offset = 0x4, fixed_abs, tag = 'smem constant byte address 0x4 - core index']
  #allocation1 [shape = 'u32[144,128]{1,0:T(1,128)}', space=vmem, size = 0x12000, scoped, tag = 'internal scratch']
  #allocation2 [shape = 'f32[2,2,32]{2,1,0:T(2,128)}', space=vmem, size = 0x800, scoped, tag = 'scratch operand']
  %s0 = inlined_call_operand.vmem [shape: f32[4,2,16], index: 0, kind: input, shape index: {}]
  %s1 = inlined_call_operand.vmem [shape: f32[2,2,32], index: 1, kind: input, shape index: {}]
  %s2 = inlined_call_operand.vmem [shape: f32[2,64,32], index: 2, kind: input, shape index: {}]
  %s3 = inlined_call_operand.vmem [shape: bf16[320,128], index: 3, kind: input, shape index: {}]
  %s4 = inlined_call_operand.vmem [shape: f32[4,2,128], index: 4, kind: output, shape index: {}]
  %s5 = sld [smem:[#allocation0]]
  $region53: #{_forward_seq.1} parent=0
    _
  %s7 = ssub.s32 1, %s5
  %s8 = scalar_select 0, %s7, %s5
  loop: start=0, step=1, limit=6
  $region2: #{_forward_seq.1} parent=0 // loop_pre_header
    _
  $region3: #{_forward_seq.1} parent=0 // loop_header
    %s10 = sphi 0, %s14
    %p11 = scmp.ge.s32.totalorder %s10, 6
    %s20 = sphi 0, %s22
    %s23 = sphi 0, %s20
    %s24 = sphi 0, %s23
    %s40 = sphi 0, %s24
    %s44 = sphi 0, %s44
    %s46 = sphi 0, %s44
    %s47 = sphi 0, %s46
    %s61 = sphi 0, %s47
    %s65 = sphi 0, %s65
    %s67 = sphi 0, %s65
    %s68 = sphi 0, %s67
    %s82 = sphi 0, %s68
    %s86 = sphi 0, %s86
    %s88 = sphi 0, %s86
    %s89 = sphi 0, %s88
    %s103 = sphi 0, %s89
    %s109 = sphi 0, %s111
    %s112 = sphi 0, %s109
    %s113 = sphi 0, %s112
    %s129 = sphi 0, %s113
  $region4: #{_forward_seq.1} parent=0 // loop_header_branch
    %13 = sbr.rel (%p11) target = $region8
  $region5: #{_forward_seq.1} parent=0 // loop_body
    %s15 = ssub.s32 %s10, 1
    %s16 = ssub.s32 %s10, 2
    %s17 = sadd.s32 %s10, 1
    %s18 = ssub.s32 %s10, %s17
    %p19 = scmp.eq.s32.totalorder %s18, 0
    %s21 = sadd.s32 %s20, 1
    %s22 = scalar_select %p19, %s20, %s21
    %p25 = pneg %p19
    %p26 = scmp.eq.s32.totalorder %s10, 3
    %p27 = por %p25, %p26
    %p28 = scmp.ne.s32.totalorder %s20, %s23
    %p29 = scmp.eq.s32.totalorder %s10, 0
    %p30 = por %p28, %p29
    %p31 = scmp.ne.s32.totalorder %s20, %s23
    %p32 = scmp.eq.s32.totalorder %s15, 3
    %p33 = por %p31, %p32
    %p34 = scmp.ne.s32.totalorder %s23, %s24
    %p35 = scmp.eq.s32.totalorder %s15, 0
    %p36 = por %p34, %p35
    %p37 = scmp.ne.s32.totalorder %s23, %s24
    %p38 = scmp.eq.s32.totalorder %s16, 3
    %p39 = por %p37, %p38
    %p41 = scmp.ne.s32.totalorder %s24, %s40
    %p42 = scmp.eq.s32.totalorder %s16, 0
    %p43 = por %p41, %p42
    %s45 = sadd.s32 %s44, 1
    %p48 = scmp.eq.s32.totalorder %s10, 3
    %p49 = scmp.ne.s32.totalorder %s44, %s46
    %p50 = scmp.eq.s32.totalorder %s10, 0
    %p51 = por %p49, %p50
    %p52 = scmp.ne.s32.totalorder %s44, %s46
    %p53 = scmp.eq.s32.totalorder %s15, 3
    %p54 = por %p52, %p53
    %p55 = scmp.ne.s32.totalorder %s46, %s47
    %p56 = scmp.eq.s32.totalorder %s15, 0
    %p57 = por %p55, %p56
    %p58 = scmp.ne.s32.totalorder %s46, %s47
    %p59 = scmp.eq.s32.totalorder %s16, 3
    %p60 = por %p58, %p59
    %p62 = scmp.ne.s32.totalorder %s47, %s61
    %p63 = scmp.eq.s32.totalorder %s16, 0
    %p64 = por %p62, %p63
    %s66 = sadd.s32 %s65, 1
    %p69 = scmp.eq.s32.totalorder %s10, 3
    %p70 = scmp.ne.s32.totalorder %s65, %s67
    %p71 = scmp.eq.s32.totalorder %s10, 0
    %p72 = por %p70, %p71
    %p73 = scmp.ne.s32.totalorder %s65, %s67
    %p74 = scmp.eq.s32.totalorder %s15, 3
    %p75 = por %p73, %p74
    %p76 = scmp.ne.s32.totalorder %s67, %s68
    %p77 = scmp.eq.s32.totalorder %s15, 0
    %p78 = por %p76, %p77
    %p79 = scmp.ne.s32.totalorder %s67, %s68
    %p80 = scmp.eq.s32.totalorder %s16, 3
    %p81 = por %p79, %p80
    %p83 = scmp.ne.s32.totalorder %s68, %s82
    %p84 = scmp.eq.s32.totalorder %s16, 0
    %p85 = por %p83, %p84
    %s87 = sadd.s32 %s86, 1
    %p90 = scmp.eq.s32.totalorder %s10, 3
    %p91 = scmp.ne.s32.totalorder %s86, %s88
    %p92 = scmp.eq.s32.totalorder %s10, 0
    %p93 = por %p91, %p92
    %p94 = scmp.ne.s32.totalorder %s86, %s88
    %p95 = scmp.eq.s32.totalorder %s15, 3
    %p96 = por %p94, %p95
    %p97 = scmp.ne.s32.totalorder %s88, %s89
    %p98 = scmp.eq.s32.totalorder %s15, 0
    %p99 = por %p97, %p98
    %p100 = scmp.ne.s32.totalorder %s88, %s89
    %p101 = scmp.eq.s32.totalorder %s16, 3
    %p102 = por %p100, %p101
    %p104 = scmp.ne.s32.totalorder %s89, %s103
    %p105 = scmp.eq.s32.totalorder %s16, 0
    %p106 = por %p104, %p105
    %s107 = ssub.s32 %s10, %s17
    %p108 = scmp.eq.s32.totalorder %s107, 0
    %s110 = sadd.s32 %s109, 1
    %s111 = scalar_select %p108, %s109, %s110
    %p114 = pneg %p108
    %p115 = scmp.eq.s32.totalorder %s10, 3
    %p116 = por %p114, %p115
    %p117 = scmp.ne.s32.totalorder %s109, %s112
    %p118 = scmp.eq.s32.totalorder %s10, 0
    %p119 = por %p117, %p118
    %p120 = scmp.ne.s32.totalorder %s109, %s112
    %p121 = scmp.eq.s32.totalorder %s15, 3
    %p122 = por %p120, %p121
    %p123 = scmp.ne.s32.totalorder %s112, %s113
    %p124 = scmp.eq.s32.totalorder %s15, 0
    %p125 = por %p123, %p124
    %p126 = scmp.ne.s32.totalorder %s112, %s113
    %p127 = scmp.eq.s32.totalorder %s16, 3
    %p128 = por %p126, %p127
    %p130 = scmp.ne.s32.totalorder %s113, %s129
    %p131 = scmp.eq.s32.totalorder %s16, 0
    %p132 = por %p130, %p131
    %p133 = scmp.le.s32.totalorder 1, %s10
    %p134 = scmp.lt.s32.totalorder %s10, 5
    %p135 = pnand %p133, %p134
    %p136 = pneg %p135
    // Predicated region
    $region9: #{_forward_seq.1} parent=5 // pred_check
      _
    $region10: #{_forward_seq.1} parent=5 // pred_check_branch
      %138 = sbr.rel (%p135) target = $region12
    $region11: #{_forward_seq.1} parent=5 // pred_region
      %s139 = ssub.s32 %s10, 1
      // Predicated region
      $region13: #{_forward_seq.1} parent=11 // pred_check
        %p140 = pneg %p57
      $region14: #{_forward_seq.1} parent=11 // pred_check_branch
        %142 = sbr.rel (%p140) target = $region16
      $region15: #{_forward_seq.1} parent=11 // pred_region
        _
      $region16: #{_forward_seq.1} parent=11 // pred_fallthru
        _
      // Predicated region
      $region17: #{_forward_seq.1} parent=11 // pred_check
        %p143 = pneg %p78
      $region18: #{_forward_seq.1} parent=11 // pred_check_branch
        %145 = sbr.rel (%p143) target = $region20
      $region19: #{_forward_seq.1} parent=11 // pred_region
        _
      $region20: #{_forward_seq.1} parent=11 // pred_fallthru
        _
      // Predicated region
      $region21: #{_forward_seq.1} parent=11 // pred_check
        %p146 = pneg %p99
      $region22: #{_forward_seq.1} parent=11 // pred_check_branch
        %148 = sbr.rel (%p146) target = $region24
      $region23: #{_forward_seq.1} parent=11 // pred_region
        _
      $region24: #{_forward_seq.1} parent=11 // pred_fallthru
        _
    $region12: #{_forward_seq.1} parent=5 // pred_fallthru
      _
    %p149 = scmp.lt.s32.totalorder %s10, 4
    // Predicated region
    $region25: #{_forward_seq.1} parent=5 // pred_check
      %p150 = pneg %p149
    $region26: #{_forward_seq.1} parent=5 // pred_check_branch
      %152 = sbr.rel (%p150) target = $region28
    $region27: #{_forward_seq.1} parent=5 // pred_region
      // Predicated region
      $region29: #{_forward_seq.1} parent=27 // pred_check
        %p153 = pneg %p30
      $region30: #{_forward_seq.1} parent=27 // pred_check_branch
        %155 = sbr.rel (%p153) target = $region32
      $region31: #{_forward_seq.1} parent=27 // pred_region
        %p156 = scmp.lt.s32.totalorder %s10, 3
        %s157 = scalar_select %p156, %s10, 3
        %s158 = smul.addr %s157, 2
        %s159 = scalar_lea.vmem %s0, %s158
      $region32: #{_forward_seq.1} parent=27 // pred_fallthru
        _
    $region28: #{_forward_seq.1} parent=5 // pred_fallthru
      _
    %p160 = scmp.le.s32.totalorder 1, %s10
    %p161 = scmp.lt.s32.totalorder %s10, 5
    %p162 = pnand %p160, %p161
    %p163 = pneg %p162
    // Predicated region
    $region33: #{_forward_seq.1} parent=5 // pred_check
      _
    $region34: #{_forward_seq.1} parent=5 // pred_check_branch
      %165 = sbr.rel (%p162) target = $region36
    $region35: #{_forward_seq.1} parent=5 // pred_region
      %s166 = ssub.s32 %s10, 1
      %p167 = scmp.lt.s32.totalorder %s15, 3
      %s168 = scalar_select %p167, %s15, 3
      %s169 = smul.addr %s168, 2
      %s170 = scalar_lea.vmem %s0, %s169
      %p171 = pneg %p36
      %p172 = pneg %p33
      %p173 = pneg %p57
      %p174 = pneg %p54
      %p175 = pneg %p78
      %p176 = pneg %p75
      %p177 = pneg %p99
      %p178 = pneg %p96
      %p179 = pneg %p125
      %p180 = pneg %p122
      %p181 = scmp.lt.s32.totalorder %s15, 3
      %s182 = scalar_select %p181, %s15, 3
      %s183 = smul.addr %s182, 2
      %s184 = scalar_lea.vmem %s4, %s183
      %p185 = scmp.lt.s32.totalorder %s15, 3
      %s186 = scalar_select %p185, %s15, 3
      %s187 = smul.addr %s186, 2
      %s188 = scalar_lea.vmem %s0, %s187
      %p189 = scmp.lt.s32.totalorder %s15, 3
      %s190 = scalar_select %p189, %s15, 3
      %s191 = smul.addr %s190, 2
      %s192 = scalar_lea.vmem %s4, %s191
      %p194 = scmp.eq.s32.totalorder %s15, 0
      // Predicated region
      $region37: #{_forward_seq.1} parent=35 // pred_check
        %p195 = pneg %p194
      $region38: #{_forward_seq.1} parent=35 // pred_check_branch
        %197 = sbr.rel (%p195) target = $region40
      $region39: #{_forward_seq.1} parent=35 // pred_region
        %v198 = vld [vmem:[%s1] sm:$0x3]
        %v199 = vld [vmem:[%s1 + $0x2] sm:$0x3]
        %vm200 = vcmask 254976
        %201 = vst.msk [vmem:[#allocation2] sm:$0x3] %vm200, %v198
        %202 = vst.msk [vmem:[#allocation2 + $0x2] sm:$0x3] %vm200, %v199
      $region40: #{_forward_seq.1} parent=35 // pred_fallthru
        _
      %v203 = vld [vmem:[%s3 + $0x98] sm:$0xf]
      %v204 = vunpack.c.l.bf16 %v203
      %v205 = vld [vmem:[%s188] sm:$0x3]
      %v206 = vpack.c.bf16 %v205, %v205
      %v207 = vld [vmem:[%s3] sm:$0xf]
      %v208 = vld [vmem:[%s3 + $0x4] sm:$0xf]
      %v209 = vlaneseq
      %v210 = vshrl.u32 %v209, 7
      %v211 = vsub.s32 0, %v210
      %v212 = vrot.slane %v204, %v211
      %v215 = vunpack.c.l.b16 %v207
      %v216 = vunpack.c.l.b16 %v208
      %v217 = vpack.c.b16 %v216, %v215
      %vm219 = vcmask 130048
      %v221 = vsel %vm219, %v206, 0
      %223 = vmatprep.subr.bf16.mxu0 0
      %224 = vmatpush1.bf16.msra.mxu0 0
      %225 = vmatprep.subr.bf16.mxu0 0
      %226 = vmatpush1.bf16.msra.mxu0 0
      %227 = vmatprep.subr.bf16.mxu0 0
      %228 = vmatpush1.bf16.msra.mxu0 0
      %229 = vmatprep.subr.bf16.mxu0 0
      %230 = vmatpush1.bf16.msra.mxu0 0
      %231 = vmatprep.subr.bf16.mxu0 0
      %232 = vmatpush1.bf16.msra.mxu0 0
      %233 = vmatprep.subr.bf16.mxu0 0
      %234 = vmatpush1.bf16.msra.mxu0 0
      %235 = vmatprep.subr.bf16.mxu0 0
      %236 = vmatpush1.bf16.msra.mxu0 0
      %237 = vmatprep.subr.bf16.mxu0 0
      %238 = vmatpush1.bf16.msra.mxu0 %v217
      %239 = vmatprep.subr.bf16.mxu0 0
      %240 = vmatpush2.bf16.msra.mxu0 0
      %241 = vmatprep.subr.bf16.mxu0 0
      %242 = vmatpush2.bf16.msra.mxu0 0
      %243 = vmatprep.subr.bf16.mxu0 0
      %244 = vmatpush2.bf16.msra.mxu0 0
      %245 = vmatprep.subr.bf16.mxu0 0
      %246 = vmatpush2.bf16.msra.mxu0 0
      %247 = vmatprep.subr.bf16.mxu0 0
      %248 = vmatpush2.bf16.msra.mxu0 0
      %249 = vmatprep.subr.bf16.mxu0 0
      %250 = vmatpush2.bf16.msra.mxu0 0
      %251 = vmatprep.subr.bf16.mxu0 0
      %252 = vmatpush2.bf16.msra.mxu0 0
      %253 = vmatprep.subr.bf16.mxu0 0
      %254 = vmatpush2.bf16.msra.mxu0 0
      %255 = vmatprep.mubr.bf16.mxu0 0
      %256 = vmatmul.mubr.bf16.gmra.mxu0 %v221
      %v257 = vpop.f32.mrf.mxu0
      %v258 = vadd.f32 %v212, %v257
      %v259 = vpop.f32.mrf.mxu0
      %v260 = vpop.f32.mrf.mxu0
      %v261 = vpop.f32.mrf.mxu0
      %262 = vdwg.mxu0
      %vm263 = vcmp.gt.f32.partialorder %v258, 0.0
      %v264 = vmul.f32 %v258, 1.442695
      %v265 = vpow.pop %v264
      %v266 = vsub.f32 %v265, 1.0
      %v267 = vmul.f32 %v266, 1.6732632
      %v268 = vsel %vm263, %v258, %v267
      %v269 = vmul.f32 %v268, 1.050701
      %s270 = scalar_lea.vmem [#allocation2], 2
      %v271 = vld [vmem:[%s270] sm:$0x3]
      %v272 = vpack.c.bf16 %v269, %v269
      %v273 = vld [vmem:[%s3 + $0x8] sm:$0xf]
      %v274 = vld [vmem:[%s3 + $0xc] sm:$0xf]
      %v275 = vld [vmem:[%s3 + $0x10] sm:$0xf]
      %v276 = vld [vmem:[%s3 + $0x14] sm:$0xf]
      %v277 = vpack.c.bf16 %v271, %v271
      %v278 = vld [vmem:[%s3 + $0x18] sm:$0xf]
      %v279 = vld [vmem:[%s3 + $0x1c] sm:$0xf]
      %v280 = vld [vmem:[%s3 + $0x20] sm:$0xf]
      %v281 = vld [vmem:[%s3 + $0x24] sm:$0xf]
      %v286 = vunpack.c.l.b16 %v278
      %v287 = vunpack.c.l.b16 %v279
      %v288 = vunpack.c.l.b16 %v280
      %v289 = vunpack.c.l.b16 %v281
      %v290 = vpack.c.b16 %v287, %v286
      %v291 = vpack.c.b16 %v289, %v288
      %vm294 = vcmask 261120
      %v296 = vsel %vm294, %v277, 0
      %298 = vmatprep.subr.bf16.mxu0 0
      %299 = vmatpush1.bf16.msra.mxu0 0
      %300 = vmatprep.subr.bf16.mxu0 0
      %301 = vmatpush1.bf16.msra.mxu0 0
      %302 = vmatprep.subr.bf16.mxu0 0
      %303 = vmatpush1.bf16.msra.mxu0 0
      %304 = vmatprep.subr.bf16.mxu0 0
      %305 = vmatpush1.bf16.msra.mxu0 0
      %306 = vmatprep.subr.bf16.mxu0 0
      %307 = vmatpush1.bf16.msra.mxu0 0
      %308 = vmatprep.subr.bf16.mxu0 0
      %309 = vmatpush1.bf16.msra.mxu0 0
      %310 = vmatprep.subr.bf16.mxu0 0
      %311 = vmatpush1.bf16.msra.mxu0 %v291
      %312 = vmatprep.subr.bf16.mxu0 0
      %313 = vmatpush1.bf16.msra.mxu0 %v290
      %314 = vmatprep.subr.bf16.mxu0 0
      %315 = vmatpush2.bf16.msra.mxu0 0
      %316 = vmatprep.subr.bf16.mxu0 0
      %317 = vmatpush2.bf16.msra.mxu0 0
      %318 = vmatprep.subr.bf16.mxu0 0
      %319 = vmatpush2.bf16.msra.mxu0 0
      %320 = vmatprep.subr.bf16.mxu0 0
      %321 = vmatpush2.bf16.msra.mxu0 0
      %322 = vmatprep.subr.bf16.mxu0 0
      %323 = vmatpush2.bf16.msra.mxu0 0
      %324 = vmatprep.subr.bf16.mxu0 0
      %325 = vmatpush2.bf16.msra.mxu0 0
      %326 = vmatprep.subr.bf16.mxu0 0
      %327 = vmatpush2.bf16.msra.mxu0 0
      %328 = vmatprep.subr.bf16.mxu0 0
      %329 = vmatpush2.bf16.msra.mxu0 0
      %330 = vmatprep.mubr.bf16.mxu0 0
      %331 = vmatmul.mubr.bf16.gmra.mxu0 %v296
      %v332 = vpop.f32.mrf.mxu0
      %v333 = vadd.f32 0.0, %v332
      %v334 = vpop.f32.mrf.mxu0
      %v335 = vpop.f32.mrf.mxu0
      %v336 = vpop.f32.mrf.mxu0
      %337 = vdwg.mxu0
      %v342 = vunpack.c.l.b16 %v273
      %v343 = vunpack.c.l.b16 %v274
      %v344 = vunpack.c.l.b16 %v275
      %v345 = vunpack.c.l.b16 %v276
      %v346 = vpack.c.b16 %v343, %v342
      %v347 = vpack.c.b16 %v345, %v344
      %v351 = vsel %vm294, %v272, 0
      %353 = vmatprep.subr.bf16.mxu0 0
      %354 = vmatpush1.bf16.msra.mxu0 0
      %355 = vmatprep.subr.bf16.mxu0 0
      %356 = vmatpush1.bf16.msra.mxu0 0
      %357 = vmatprep.subr.bf16.mxu0 0
      %358 = vmatpush1.bf16.msra.mxu0 0
      %359 = vmatprep.subr.bf16.mxu0 0
      %360 = vmatpush1.bf16.msra.mxu0 0
      %361 = vmatprep.subr.bf16.mxu0 0
      %362 = vmatpush1.bf16.msra.mxu0 0
      %363 = vmatprep.subr.bf16.mxu0 0
      %364 = vmatpush1.bf16.msra.mxu0 0
      %365 = vmatprep.subr.bf16.mxu0 0
      %366 = vmatpush1.bf16.msra.mxu0 %v347
      %367 = vmatprep.subr.bf16.mxu0 0
      %368 = vmatpush1.bf16.msra.mxu0 %v346
      %369 = vmatprep.subr.bf16.mxu0 0
      %370 = vmatpush2.bf16.msra.mxu0 0
      %371 = vmatprep.subr.bf16.mxu0 0
      %372 = vmatpush2.bf16.msra.mxu0 0
      %373 = vmatprep.subr.bf16.mxu0 0
      %374 = vmatpush2.bf16.msra.mxu0 0
      %375 = vmatprep.subr.bf16.mxu0 0
      %376 = vmatpush2.bf16.msra.mxu0 0
      %377 = vmatprep.subr.bf16.mxu0 0
      %378 = vmatpush2.bf16.msra.mxu0 0
      %379 = vmatprep.subr.bf16.mxu0 0
      %380 = vmatpush2.bf16.msra.mxu0 0
      %381 = vmatprep.subr.bf16.mxu0 0
      %382 = vmatpush2.bf16.msra.mxu0 0
      %383 = vmatprep.subr.bf16.mxu0 0
      %384 = vmatpush2.bf16.msra.mxu0 0
      %385 = vmatprep.mubr.bf16.mxu0 0
      %386 = vmatmul.mubr.bf16.gmra.mxu0 %v351
      %v387 = vpop.f32.mrf.mxu0
      %v388 = vadd.f32 %v333, %v387
      %v389 = vpop.f32.mrf.mxu0
      %v390 = vpop.f32.mrf.mxu0
      %v391 = vpop.f32.mrf.mxu0
      %392 = vdwg.mxu0
      %v393 = vlaneseq
      %v394 = vshrl.u32 %v393, 7
      %v395 = vsub.s32 1, %v394
      %v396 = vrot.slane %v204, %v395
      %v397 = vadd.f32 %v388, %v396
      %vm398 = vcmask 517120
      %v399 = vsel %vm398, %v397, -inf
      %400 = vmax.xlane.f32.xlu0 %v399
      %v401 = vpop.xlane.xlu0 %400
      %v402 = vsub.f32 %v397, %v401
      %v403 = vmul.f32 %v402, 1.442695
      %v404 = vpow.pop %v403
      %v405 = vsel %vm398, %v404, 0.0
      %406 = vadd.xlane.f32.xlu0 %v405
      %v407 = vpop.xlane.xlu0 %406
      %v408 = vrcp.pop %v407
      %v409 = vmul.f32 %v404, %v408
      %v410 = vlaneseq
      %v411 = vshrl.u32 %v410, 7
      %v412 = vsub.s32 0, %v411
      %v413 = vrot.slane %v409, %v412
      %415 = vbcast.lane.b32.xlu0 %v413, 256
      %v416 = vpop.permute.xlu0 %415
      %s418 = sor.u32 256, 8
      %419 = vbcast.lane.b32.xlu0 %v413, %s418
      %v420 = vpop.permute.xlu0 %419
      %s422 = sor.u32 256, 16
      %423 = vbcast.lane.b32.xlu0 %v413, %s422
      %v424 = vpop.permute.xlu0 %423
      %s426 = sor.u32 256, 24
      %427 = vbcast.lane.b32.xlu0 %v413, %s426
      %v428 = vpop.permute.xlu0 %427
      %s430 = sor.u32 256, 32
      %431 = vbcast.lane.b32.xlu0 %v413, %s430
      %v432 = vpop.permute.xlu0 %431
      %s434 = sor.u32 256, 40
      %435 = vbcast.lane.b32.xlu0 %v413, %s434
      %v436 = vpop.permute.xlu0 %435
      %s438 = sor.u32 256, 48
      %439 = vbcast.lane.b32.xlu0 %v413, %s438
      %v440 = vpop.permute.xlu0 %439
      %s442 = sor.u32 256, 56
      %443 = vbcast.lane.b32.xlu0 %v413, %s442
      %v444 = vpop.permute.xlu0 %443
      %v445 = vlaneseq
      %v446 = vshrl.u32 %v445, 7
      %v447 = vsub.s32 1, %v446
      %v448 = vrot.slane %v409, %v447
      %450 = vbcast.lane.b32.xlu0 %v448, 256
      %v451 = vpop.permute.xlu0 %450
      %s453 = sor.u32 256, 8
      %454 = vbcast.lane.b32.xlu0 %v448, %s453
      %v455 = vpop.permute.xlu0 %454
      %s457 = sor.u32 256, 16
      %458 = vbcast.lane.b32.xlu0 %v448, %s457
      %v459 = vpop.permute.xlu0 %458
      %s461 = sor.u32 256, 24
      %462 = vbcast.lane.b32.xlu0 %v448, %s461
      %v463 = vpop.permute.xlu0 %462
      %s465 = sor.u32 256, 32
      %466 = vbcast.lane.b32.xlu0 %v448, %s465
      %v467 = vpop.permute.xlu0 %466
      %s469 = sor.u32 256, 40
      %470 = vbcast.lane.b32.xlu0 %v448, %s469
      %v471 = vpop.permute.xlu0 %470
      %s473 = sor.u32 256, 48
      %474 = vbcast.lane.b32.xlu0 %v448, %s473
      %v475 = vpop.permute.xlu0 %474
      %s477 = sor.u32 256, 56
      %478 = vbcast.lane.b32.xlu0 %v448, %s477
      %v479 = vpop.permute.xlu0 %478
      %v480 = vld [vmem:[%s2] sm:$0xff]
      %v481 = vld [vmem:[%s2 + $0x8] sm:$0xff]
      %v482 = vld [vmem:[%s2 + $0x10] sm:$0xff]
      %v483 = vld [vmem:[%s2 + $0x18] sm:$0xff]
      %v484 = vld [vmem:[%s2 + $0x20] sm:$0xff]
      %v485 = vld [vmem:[%s2 + $0x28] sm:$0xff]
      %v486 = vld [vmem:[%s2 + $0x30] sm:$0xff]
      %v487 = vld [vmem:[%s2 + $0x38] sm:$0xff]
      %v488 = vld [vmem:[%s2 + $0x40] sm:$0xff]
      %v489 = vld [vmem:[%s2 + $0x48] sm:$0xff]
      %v490 = vld [vmem:[%s2 + $0x50] sm:$0xff]
      %v491 = vld [vmem:[%s2 + $0x58] sm:$0xff]
      %v492 = vld [vmem:[%s2 + $0x60] sm:$0xff]
      %v493 = vld [vmem:[%s2 + $0x68] sm:$0xff]
      %v494 = vld [vmem:[%s2 + $0x70] sm:$0xff]
      %v495 = vld [vmem:[%s2 + $0x78] sm:$0xff]
      %v496 = vmul.f32 %v416, %v480
      %v497 = vmul.f32 %v420, %v481
      %v498 = vmul.f32 %v424, %v482
      %v499 = vmul.f32 %v428, %v483
      %v500 = vmul.f32 %v432, %v484
      %v501 = vmul.f32 %v436, %v485
      %v502 = vmul.f32 %v440, %v486
      %v503 = vmul.f32 %v444, %v487
      %v504 = vmul.f32 %v451, %v488
      %v505 = vmul.f32 %v455, %v489
      %v506 = vmul.f32 %v459, %v490
      %v507 = vmul.f32 %v463, %v491
      %v508 = vmul.f32 %v467, %v492
      %v509 = vmul.f32 %v471, %v493
      %v510 = vmul.f32 %v475, %v494
      %v511 = vmul.f32 %v479, %v495
      %v512 = vsel %vm294, %v496, 0.0
      %v513 = vsel %vm294, %v497, 0.0
      %v514 = vadd.f32 %v512, %v513
      %v515 = vsel %vm294, %v498, 0.0
      %v516 = vadd.f32 %v514, %v515
      %v517 = vsel %vm294, %v499, 0.0
      %v518 = vadd.f32 %v516, %v517
      %v519 = vsel %vm294, %v500, 0.0
      %v520 = vadd.f32 %v518, %v519
      %v521 = vsel %vm294, %v501, 0.0
      %v522 = vadd.f32 %v520, %v521
      %v523 = vsel %vm294, %v502, 0.0
      %v524 = vadd.f32 %v522, %v523
      %v525 = vsel %vm294, %v503, 0.0
      %v526 = vadd.f32 %v524, %v525
      %v527 = vrot.slane %v526, 4
      %v528 = vadd.f32 %v526, %v527
      %v529 = vrot.slane %v528, 2
      %v530 = vadd.f32 %v528, %v529
      %v531 = vrot.slane %v530, 1
      %v532 = vadd.f32 %v530, %v531
      %v533 = vsel %vm294, %v504, 0.0
      %v534 = vsel %vm294, %v505, 0.0
      %v535 = vadd.f32 %v533, %v534
      %v536 = vsel %vm294, %v506, 0.0
      %v537 = vadd.f32 %v535, %v536
      %v538 = vsel %vm294, %v507, 0.0
      %v539 = vadd.f32 %v537, %v538
      %v540 = vsel %vm294, %v508, 0.0
      %v541 = vadd.f32 %v539, %v540
      %v542 = vsel %vm294, %v509, 0.0
      %v543 = vadd.f32 %v541, %v542
      %v544 = vsel %vm294, %v510, 0.0
      %v545 = vadd.f32 %v543, %v544
      %v546 = vsel %vm294, %v511, 0.0
      %v547 = vadd.f32 %v545, %v546
      %v548 = vrot.slane %v547, 4
      %v549 = vadd.f32 %v547, %v548
      %v550 = vrot.slane %v549, 2
      %v551 = vadd.f32 %v549, %v550
      %v552 = vrot.slane %v551, 1
      %v553 = vadd.f32 %v551, %v552
      %v554 = vld [vmem:[%s3 + $0x28] sm:$0xf]
      %v555 = vld [vmem:[%s3 + $0x2c] sm:$0xf]
      %v556 = vld [vmem:[%s3 + $0x30] sm:$0xf]
      %v557 = vld [vmem:[%s3 + $0x34] sm:$0xf]
      %v558 = vpack.c.bf16 %v532, %v532
      %v559 = vpack.c.bf16 %v553, %v553
      %v560 = vld [vmem:[%s3 + $0x38] sm:$0xf]
      %v561 = vld [vmem:[%s3 + $0x3c] sm:$0xf]
      %v562 = vld [vmem:[%s3 + $0x40] sm:$0xf]
      %v563 = vld [vmem:[%s3 + $0x44] sm:$0xf]
      %v566 = vunpack.c.l.b16 %v558
      %v567 = vunpack.c.l.b16 %v559
      %vm568 = vcmask 1041409
      %v569 = vsel %vm568, %v567, %v566
      %v570 = vpack.c.b16 %v569, %v569
      %v575 = vunpack.c.l.b16 %v560
      %v576 = vunpack.c.l.b16 %v561
      %v577 = vunpack.c.l.b16 %v562
      %v578 = vunpack.c.l.b16 %v563
      %v579 = vpack.c.b16 %v576, %v575
      %v580 = vpack.c.b16 %v578, %v577
      %v584 = vsel %vm294, %v570, 0
      %586 = vmatprep.subr.bf16.mxu0 0
      %587 = vmatpush1.bf16.msra.mxu0 0
      %588 = vmatprep.subr.bf16.mxu0 0
      %589 = vmatpush1.bf16.msra.mxu0 0
      %590 = vmatprep.subr.bf16.mxu0 0
      %591 = vmatpush1.bf16.msra.mxu0 0
      %592 = vmatprep.subr.bf16.mxu0 0
      %593 = vmatpush1.bf16.msra.mxu0 0
      %594 = vmatprep.subr.bf16.mxu0 0
      %595 = vmatpush1.bf16.msra.mxu0 0
      %596 = vmatprep.subr.bf16.mxu0 0
      %597 = vmatpush1.bf16.msra.mxu0 0
      %598 = vmatprep.subr.bf16.mxu0 0
      %599 = vmatpush1.bf16.msra.mxu0 %v580
      %600 = vmatprep.subr.bf16.mxu0 0
      %601 = vmatpush1.bf16.msra.mxu0 %v579
      %602 = vmatprep.subr.bf16.mxu0 0
      %603 = vmatpush2.bf16.msra.mxu0 0
      %604 = vmatprep.subr.bf16.mxu0 0
      %605 = vmatpush2.bf16.msra.mxu0 0
      %606 = vmatprep.subr.bf16.mxu0 0
      %607 = vmatpush2.bf16.msra.mxu0 0
      %608 = vmatprep.subr.bf16.mxu0 0
      %609 = vmatpush2.bf16.msra.mxu0 0
      %610 = vmatprep.subr.bf16.mxu0 0
      %611 = vmatpush2.bf16.msra.mxu0 0
      %612 = vmatprep.subr.bf16.mxu0 0
      %613 = vmatpush2.bf16.msra.mxu0 0
      %614 = vmatprep.subr.bf16.mxu0 0
      %615 = vmatpush2.bf16.msra.mxu0 0
      %616 = vmatprep.subr.bf16.mxu0 0
      %617 = vmatpush2.bf16.msra.mxu0 0
      %618 = vmatprep.mubr.bf16.mxu0 0
      %619 = vmatmul.mubr.bf16.gmra.mxu0 %v584
      %v620 = vpop.f32.mrf.mxu0
      %v621 = vadd.f32 0.0, %v620
      %v622 = vpop.f32.mrf.mxu0
      %v623 = vpop.f32.mrf.mxu0
      %v624 = vpop.f32.mrf.mxu0
      %625 = vdwg.mxu0
      %v630 = vunpack.c.l.b16 %v554
      %v631 = vunpack.c.l.b16 %v555
      %v632 = vunpack.c.l.b16 %v556
      %v633 = vunpack.c.l.b16 %v557
      %v634 = vpack.c.b16 %v631, %v630
      %v635 = vpack.c.b16 %v633, %v632
      %638 = vmatprep.subr.bf16.mxu0 0
      %639 = vmatpush1.bf16.msra.mxu0 0
      %640 = vmatprep.subr.bf16.mxu0 0
      %641 = vmatpush1.bf16.msra.mxu0 0
      %642 = vmatprep.subr.bf16.mxu0 0
      %643 = vmatpush1.bf16.msra.mxu0 0
      %644 = vmatprep.subr.bf16.mxu0 0
      %645 = vmatpush1.bf16.msra.mxu0 0
      %646 = vmatprep.subr.bf16.mxu0 0
      %647 = vmatpush1.bf16.msra.mxu0 0
      %648 = vmatprep.subr.bf16.mxu0 0
      %649 = vmatpush1.bf16.msra.mxu0 0
      %650 = vmatprep.subr.bf16.mxu0 0
      %651 = vmatpush1.bf16.msra.mxu0 %v635
      %652 = vmatprep.subr.bf16.mxu0 0
      %653 = vmatpush1.bf16.msra.mxu0 %v634
      %654 = vmatprep.subr.bf16.mxu0 0
      %655 = vmatpush2.bf16.msra.mxu0 0
      %656 = vmatprep.subr.bf16.mxu0 0
      %657 = vmatpush2.bf16.msra.mxu0 0
      %658 = vmatprep.subr.bf16.mxu0 0
      %659 = vmatpush2.bf16.msra.mxu0 0
      %660 = vmatprep.subr.bf16.mxu0 0
      %661 = vmatpush2.bf16.msra.mxu0 0
      %662 = vmatprep.subr.bf16.mxu0 0
      %663 = vmatpush2.bf16.msra.mxu0 0
      %664 = vmatprep.subr.bf16.mxu0 0
      %665 = vmatpush2.bf16.msra.mxu0 0
      %666 = vmatprep.subr.bf16.mxu0 0
      %667 = vmatpush2.bf16.msra.mxu0 0
      %668 = vmatprep.subr.bf16.mxu0 0
      %669 = vmatpush2.bf16.msra.mxu0 0
      %670 = vmatprep.mubr.bf16.mxu0 0
      %671 = vmatmul.mubr.bf16.gmra.mxu0 %v351
      %v672 = vpop.f32.mrf.mxu0
      %v673 = vadd.f32 %v621, %v672
      %v674 = vpop.f32.mrf.mxu0
      %v675 = vpop.f32.mrf.mxu0
      %v676 = vpop.f32.mrf.mxu0
      %677 = vdwg.mxu0
      %v678 = vlaneseq
      %v679 = vshrl.u32 %v678, 7
      %v680 = vsub.s32 2, %v679
      %v681 = vrot.slane %v204, %v680
      %v682 = vadd.f32 %v673, %v681
      %vm683 = vcmp.gt.f32.partialorder %v682, 0.0
      %v684 = vmul.f32 %v682, 1.442695
      %v685 = vpow.pop %v684
      %v686 = vsub.f32 %v685, 1.0
      %v687 = vmul.f32 %v686, 1.6732632
      %v688 = vsel %vm683, %v682, %v687
      %v689 = vmul.f32 %v688, 1.050701
      %v690 = vld [vmem:[#allocation2] sm:$0x3]
      %v691 = vpack.c.bf16 %v689, %v689
      %v692 = vld [vmem:[%s3 + $0x48] sm:$0xf]
      %v693 = vld [vmem:[%s3 + $0x4c] sm:$0xf]
      %v694 = vld [vmem:[%s3 + $0x50] sm:$0xf]
      %v695 = vld [vmem:[%s3 + $0x54] sm:$0xf]
      %v696 = vpack.c.bf16 %v690, %v690
      %v697 = vld [vmem:[%s3 + $0x58] sm:$0xf]
      %v698 = vld [vmem:[%s3 + $0x5c] sm:$0xf]
      %v699 = vld [vmem:[%s3 + $0x60] sm:$0xf]
      %v700 = vld [vmem:[%s3 + $0x64] sm:$0xf]
      %v705 = vunpack.c.l.b16 %v697
      %v706 = vunpack.c.l.b16 %v698
      %v707 = vunpack.c.l.b16 %v699
      %v708 = vunpack.c.l.b16 %v700
      %v709 = vpack.c.b16 %v706, %v705
      %v710 = vpack.c.b16 %v708, %v707
      %v714 = vsel %vm294, %v696, 0
      %716 = vmatprep.subr.bf16.mxu0 0
      %717 = vmatpush1.bf16.msra.mxu0 0
      %718 = vmatprep.subr.bf16.mxu0 0
      %719 = vmatpush1.bf16.msra.mxu0 0
      %720 = vmatprep.subr.bf16.mxu0 0
      %721 = vmatpush1.bf16.msra.mxu0 0
      %722 = vmatprep.subr.bf16.mxu0 0
      %723 = vmatpush1.bf16.msra.mxu0 0
      %724 = vmatprep.subr.bf16.mxu0 0
      %725 = vmatpush1.bf16.msra.mxu0 0
      %726 = vmatprep.subr.bf16.mxu0 0
      %727 = vmatpush1.bf16.msra.mxu0 0
      %728 = vmatprep.subr.bf16.mxu0 0
      %729 = vmatpush1.bf16.msra.mxu0 %v710
      %730 = vmatprep.subr.bf16.mxu0 0
      %731 = vmatpush1.bf16.msra.mxu0 %v709
      %732 = vmatprep.subr.bf16.mxu0 0
      %733 = vmatpush2.bf16.msra.mxu0 0
      %734 = vmatprep.subr.bf16.mxu0 0
      %735 = vmatpush2.bf16.msra.mxu0 0
      %736 = vmatprep.subr.bf16.mxu0 0
      %737 = vmatpush2.bf16.msra.mxu0 0
      %738 = vmatprep.subr.bf16.mxu0 0
      %739 = vmatpush2.bf16.msra.mxu0 0
      %740 = vmatprep.subr.bf16.mxu0 0
      %741 = vmatpush2.bf16.msra.mxu0 0
      %742 = vmatprep.subr.bf16.mxu0 0
      %743 = vmatpush2.bf16.msra.mxu0 0
      %744 = vmatprep.subr.bf16.mxu0 0
      %745 = vmatpush2.bf16.msra.mxu0 0
      %746 = vmatprep.subr.bf16.mxu0 0
      %747 = vmatpush2.bf16.msra.mxu0 0
      %748 = vmatprep.mubr.bf16.mxu0 0
      %749 = vmatmul.mubr.bf16.gmra.mxu0 %v714
      %v750 = vpop.f32.mrf.mxu0
      %v751 = vadd.f32 0.0, %v750
      %v752 = vpop.f32.mrf.mxu0
      %v753 = vpop.f32.mrf.mxu0
      %v754 = vpop.f32.mrf.mxu0
      %755 = vdwg.mxu0
      %v760 = vunpack.c.l.b16 %v692
      %v761 = vunpack.c.l.b16 %v693
      %v762 = vunpack.c.l.b16 %v694
      %v763 = vunpack.c.l.b16 %v695
      %v764 = vpack.c.b16 %v761, %v760
      %v765 = vpack.c.b16 %v763, %v762
      %v769 = vsel %vm294, %v691, 0
      %771 = vmatprep.subr.bf16.mxu0 0
      %772 = vmatpush1.bf16.msra.mxu0 0
      %773 = vmatprep.subr.bf16.mxu0 0
      %774 = vmatpush1.bf16.msra.mxu0 0
      %775 = vmatprep.subr.bf16.mxu0 0
      %776 = vmatpush1.bf16.msra.mxu0 0
      %777 = vmatprep.subr.bf16.mxu0 0
      %778 = vmatpush1.bf16.msra.mxu0 0
      %779 = vmatprep.subr.bf16.mxu0 0
      %780 = vmatpush1.bf16.msra.mxu0 0
      %781 = vmatprep.subr.bf16.mxu0 0
      %782 = vmatpush1.bf16.msra.mxu0 0
      %783 = vmatprep.subr.bf16.mxu0 0
      %784 = vmatpush1.bf16.msra.mxu0 %v765
      %785 = vmatprep.subr.bf16.mxu0 0
      %786 = vmatpush1.bf16.msra.mxu0 %v764
      %787 = vmatprep.subr.bf16.mxu0 0
      %788 = vmatpush2.bf16.msra.mxu0 0
      %789 = vmatprep.subr.bf16.mxu0 0
      %790 = vmatpush2.bf16.msra.mxu0 0
      %791 = vmatprep.subr.bf16.mxu0 0
      %792 = vmatpush2.bf16.msra.mxu0 0
      %793 = vmatprep.subr.bf16.mxu0 0
      %794 = vmatpush2.bf16.msra.mxu0 0
      %795 = vmatprep.subr.bf16.mxu0 0
      %796 = vmatpush2.bf16.msra.mxu0 0
      %797 = vmatprep.subr.bf16.mxu0 0
      %798 = vmatpush2.bf16.msra.mxu0 0
      %799 = vmatprep.subr.bf16.mxu0 0
      %800 = vmatpush2.bf16.msra.mxu0 0
      %801 = vmatprep.subr.bf16.mxu0 0
      %802 = vmatpush2.bf16.msra.mxu0 0
      %803 = vmatprep.mubr.bf16.mxu0 0
      %804 = vmatmul.mubr.bf16.gmra.mxu0 %v769
      %v805 = vpop.f32.mrf.mxu0
      %v806 = vadd.f32 %v751, %v805
      %v807 = vpop.f32.mrf.mxu0
      %v808 = vpop.f32.mrf.mxu0
      %v809 = vpop.f32.mrf.mxu0
      %810 = vdwg.mxu0
      %v811 = vlaneseq
      %v812 = vshrl.u32 %v811, 7
      %v813 = vsub.s32 3, %v812
      %v814 = vrot.slane %v204, %v813
      %v815 = vadd.f32 %v806, %v814
      %v816 = vxor.u32 %v815, 2147483648
      %v817 = vmul.f32 %v816, 1.442695
      %v818 = vpow.pop %v817
      %v819 = vadd.f32 %v818, 1.0
      %v820 = vrcp.pop %v819
      %v821 = vmul.f32 1.0, %v820
      %823 = vrot.lane.b32.xlu0 %v815, 32
      %v824 = vpop.permute.xlu0 %823
      %v826 = vmul.f32 %v821, %v824
      %828 = vrot.lane.b32.xlu0 %v826, 64
      %v829 = vpop.permute.xlu0 %828
      %v831 = vadd.f32 %v815, %v829
      %v832 = vtanh.pop %v831
      %v833 = vsub.f32 1.0, %v821
      %835 = vrot.lane.b32.xlu0 %v832, 96
      %v836 = vpop.permute.xlu0 %835
      %v838 = vmul.f32 %v833, %v836
      %840 = vrot.lane.b32.xlu0 %v690, 32
      %v841 = vpop.permute.xlu0 %840
      %v843 = vmul.f32 %v821, %v841
      %v844 = vadd.f32 %v838, %v843
      %846 = vrot.lane.b32.xlu0 %v844, 96
      %v847 = vpop.permute.xlu0 %846
      %vm849 = vcmask 254976
      %850 = vst.msk [vmem:[#allocation2] sm:$0x3] %vm849, %v847
      %v851 = vld [vmem:[%s270] sm:$0x3]
      %v852 = vpack.c.bf16 %v844, %v844
      %v853 = vld [vmem:[%s3 + $0x68] sm:$0xf]
      %v854 = vld [vmem:[%s3 + $0x6c] sm:$0xf]
      %v855 = vld [vmem:[%s3 + $0x70] sm:$0xf]
      %v856 = vld [vmem:[%s3 + $0x74] sm:$0xf]
      %v857 = vpack.c.bf16 %v851, %v851
      %v858 = vld [vmem:[%s3 + $0x78] sm:$0xf]
      %v859 = vld [vmem:[%s3 + $0x7c] sm:$0xf]
      %v860 = vld [vmem:[%s3 + $0x80] sm:$0xf]
      %v861 = vld [vmem:[%s3 + $0x84] sm:$0xf]
      %v866 = vunpack.c.l.b16 %v858
      %v867 = vunpack.c.l.b16 %v859
      %v868 = vunpack.c.l.b16 %v860
      %v869 = vunpack.c.l.b16 %v861
      %v870 = vpack.c.b16 %v867, %v866
      %v871 = vpack.c.b16 %v869, %v868
      %v875 = vsel %vm294, %v857, 0
      %877 = vmatprep.subr.bf16.mxu0 0
      %878 = vmatpush1.bf16.msra.mxu0 0
      %879 = vmatprep.subr.bf16.mxu0 0
      %880 = vmatpush1.bf16.msra.mxu0 0
      %881 = vmatprep.subr.bf16.mxu0 0
      %882 = vmatpush1.bf16.msra.mxu0 0
      %883 = vmatprep.subr.bf16.mxu0 0
      %884 = vmatpush1.bf16.msra.mxu0 0
      %885 = vmatprep.subr.bf16.mxu0 0
      %886 = vmatpush1.bf16.msra.mxu0 0
      %887 = vmatprep.subr.bf16.mxu0 0
      %888 = vmatpush1.bf16.msra.mxu0 0
      %889 = vmatprep.subr.bf16.mxu0 0
      %890 = vmatpush1.bf16.msra.mxu0 %v871
      %891 = vmatprep.subr.bf16.mxu0 0
      %892 = vmatpush1.bf16.msra.mxu0 %v870
      %893 = vmatprep.subr.bf16.mxu0 0
      %894 = vmatpush2.bf16.msra.mxu0 0
      %895 = vmatprep.subr.bf16.mxu0 0
      %896 = vmatpush2.bf16.msra.mxu0 0
      %897 = vmatprep.subr.bf16.mxu0 0
      %898 = vmatpush2.bf16.msra.mxu0 0
      %899 = vmatprep.subr.bf16.mxu0 0
      %900 = vmatpush2.bf16.msra.mxu0 0
      %901 = vmatprep.subr.bf16.mxu0 0
      %902 = vmatpush2.bf16.msra.mxu0 0
      %903 = vmatprep.subr.bf16.mxu0 0
      %904 = vmatpush2.bf16.msra.mxu0 0
      %905 = vmatprep.subr.bf16.mxu0 0
      %906 = vmatpush2.bf16.msra.mxu0 0
      %907 = vmatprep.subr.bf16.mxu0 0
      %908 = vmatpush2.bf16.msra.mxu0 0
      %909 = vmatprep.mubr.bf16.mxu0 0
      %910 = vmatmul.mubr.bf16.gmra.mxu0 %v875
      %v911 = vpop.f32.mrf.mxu0
      %v912 = vadd.f32 0.0, %v911
      %v913 = vpop.f32.mrf.mxu0
      %v914 = vpop.f32.mrf.mxu0
      %v915 = vpop.f32.mrf.mxu0
      %916 = vdwg.mxu0
      %918 = vrot.lane.b32.xlu0 %v852, 96
      %v919 = vpop.permute.xlu0 %918
      %v924 = vunpack.c.l.b16 %v853
      %v925 = vunpack.c.l.b16 %v854
      %v926 = vunpack.c.l.b16 %v855
      %v927 = vunpack.c.l.b16 %v856
      %v928 = vpack.c.b16 %v925, %v924
      %v929 = vpack.c.b16 %v927, %v926
      %v933 = vsel %vm294, %v919, 0
      %935 = vmatprep.subr.bf16.mxu0 0
      %936 = vmatpush1.bf16.msra.mxu0 0
      %937 = vmatprep.subr.bf16.mxu0 0
      %938 = vmatpush1.bf16.msra.mxu0 0
      %939 = vmatprep.subr.bf16.mxu0 0
      %940 = vmatpush1.bf16.msra.mxu0 0
      %941 = vmatprep.subr.bf16.mxu0 0
      %942 = vmatpush1.bf16.msra.mxu0 0
      %943 = vmatprep.subr.bf16.mxu0 0
      %944 = vmatpush1.bf16.msra.mxu0 0
      %945 = vmatprep.subr.bf16.mxu0 0
      %946 = vmatpush1.bf16.msra.mxu0 0
      %947 = vmatprep.subr.bf16.mxu0 0
      %948 = vmatpush1.bf16.msra.mxu0 %v929
      %949 = vmatprep.subr.bf16.mxu0 0
      %950 = vmatpush1.bf16.msra.mxu0 %v928
      %951 = vmatprep.subr.bf16.mxu0 0
      %952 = vmatpush2.bf16.msra.mxu0 0
      %953 = vmatprep.subr.bf16.mxu0 0
      %954 = vmatpush2.bf16.msra.mxu0 0
      %955 = vmatprep.subr.bf16.mxu0 0
      %956 = vmatpush2.bf16.msra.mxu0 0
      %957 = vmatprep.subr.bf16.mxu0 0
      %958 = vmatpush2.bf16.msra.mxu0 0
      %959 = vmatprep.subr.bf16.mxu0 0
      %960 = vmatpush2.bf16.msra.mxu0 0
      %961 = vmatprep.subr.bf16.mxu0 0
      %962 = vmatpush2.bf16.msra.mxu0 0
      %963 = vmatprep.subr.bf16.mxu0 0
      %964 = vmatpush2.bf16.msra.mxu0 0
      %965 = vmatprep.subr.bf16.mxu0 0
      %966 = vmatpush2.bf16.msra.mxu0 0
      %967 = vmatprep.mubr.bf16.mxu0 0
      %968 = vmatmul.mubr.bf16.gmra.mxu0 %v933
      %v969 = vpop.f32.mrf.mxu0
      %v970 = vadd.f32 %v912, %v969
      %v971 = vpop.f32.mrf.mxu0
      %v972 = vpop.f32.mrf.mxu0
      %v973 = vpop.f32.mrf.mxu0
      %974 = vdwg.mxu0
      %v975 = vlaneseq
      %v976 = vshrl.u32 %v975, 7
      %v977 = vsub.s32 4, %v976
      %v978 = vrot.slane %v204, %v977
      %v979 = vadd.f32 %v970, %v978
      %v980 = vxor.u32 %v979, 2147483648
      %v981 = vmul.f32 %v980, 1.442695
      %v982 = vpow.pop %v981
      %v983 = vadd.f32 %v982, 1.0
      %v984 = vrcp.pop %v983
      %v985 = vmul.f32 1.0, %v984
      %987 = vrot.lane.b32.xlu0 %v979, 32
      %v988 = vpop.permute.xlu0 %987
      %v990 = vmul.f32 %v985, %v988
      %992 = vrot.lane.b32.xlu0 %v990, 64
      %v993 = vpop.permute.xlu0 %992
      %v995 = vadd.f32 %v979, %v993
      %v996 = vtanh.pop %v995
      %v997 = vsub.f32 1.0, %v985
      %999 = vrot.lane.b32.xlu0 %v996, 96
      %v1000 = vpop.permute.xlu0 %999
      %v1002 = vmul.f32 %v997, %v1000
      %1004 = vrot.lane.b32.xlu0 %v851, 32
      %v1005 = vpop.permute.xlu0 %1004
      %v1007 = vmul.f32 %v985, %v1005
      %v1008 = vadd.f32 %v1002, %v1007
      %1010 = vrot.lane.b32.xlu0 %v1008, 96
      %v1011 = vpop.permute.xlu0 %1010
      %1013 = vst.msk [vmem:[%s270] sm:$0x3] %vm849, %v1011
      %v1014 = vpack.c.bf16 %v1008, %v1008
      %v1015 = vld [vmem:[%s3 + $0x88] sm:$0xf]
      %v1016 = vld [vmem:[%s3 + $0x8c] sm:$0xf]
      %v1017 = vld [vmem:[%s3 + $0x90] sm:$0xf]
      %v1018 = vld [vmem:[%s3 + $0x94] sm:$0xf]
      %v1019 = vlaneseq
      %v1020 = vshrl.u32 %v1019, 7
      %v1021 = vsub.s32 5, %v1020
      %v1022 = vrot.slane %v204, %v1021
      %1024 = vrot.lane.b32.xlu0 %v1014, 96
      %v1025 = vpop.permute.xlu0 %1024
      %v1030 = vunpack.c.l.b16 %v1015
      %v1031 = vunpack.c.l.b16 %v1016
      %v1032 = vunpack.c.l.b16 %v1017
      %v1033 = vunpack.c.l.b16 %v1018
      %v1034 = vpack.c.b16 %v1031, %v1030
      %v1035 = vpack.c.b16 %v1033, %v1032
      %v1039 = vsel %vm294, %v1025, 0
      %1041 = vmatprep.subr.bf16.mxu0 0
      %1042 = vmatpush1.bf16.msra.mxu0 0
      %1043 = vmatprep.subr.bf16.mxu0 0
      %1044 = vmatpush1.bf16.msra.mxu0 0
      %1045 = vmatprep.subr.bf16.mxu0 0
      %1046 = vmatpush1.bf16.msra.mxu0 0
      %1047 = vmatprep.subr.bf16.mxu0 0
      %1048 = vmatpush1.bf16.msra.mxu0 0
      %1049 = vmatprep.subr.bf16.mxu0 0
      %1050 = vmatpush1.bf16.msra.mxu0 0
      %1051 = vmatprep.subr.bf16.mxu0 0
      %1052 = vmatpush1.bf16.msra.mxu0 0
      %1053 = vmatprep.subr.bf16.mxu0 0
      %1054 = vmatpush1.bf16.msra.mxu0 %v1035
      %1055 = vmatprep.subr.bf16.mxu0 0
      %1056 = vmatpush1.bf16.msra.mxu0 %v1034
      %1057 = vmatprep.subr.bf16.mxu0 0
      %1058 = vmatpush2.bf16.msra.mxu0 0
      %1059 = vmatprep.subr.bf16.mxu0 0
      %1060 = vmatpush2.bf16.msra.mxu0 0
      %1061 = vmatprep.subr.bf16.mxu0 0
      %1062 = vmatpush2.bf16.msra.mxu0 0
      %1063 = vmatprep.subr.bf16.mxu0 0
      %1064 = vmatpush2.bf16.msra.mxu0 0
      %1065 = vmatprep.subr.bf16.mxu0 0
      %1066 = vmatpush2.bf16.msra.mxu0 0
      %1067 = vmatprep.subr.bf16.mxu0 0
      %1068 = vmatpush2.bf16.msra.mxu0 0
      %1069 = vmatprep.subr.bf16.mxu0 0
      %1070 = vmatpush2.bf16.msra.mxu0 0
      %1071 = vmatprep.subr.bf16.mxu0 0
      %1072 = vmatpush2.bf16.msra.mxu0 0
      %1073 = vmatprep.mubr.bf16.mxu0 0
      %1074 = vmatmul.mubr.bf16.gmra.mxu0 %v1039
      %v1075 = vpop.f32.mrf.mxu0
      %v1076 = vadd.f32 %v1022, %v1075
      %v1077 = vpop.f32.mrf.mxu0
      %v1078 = vpop.f32.mrf.mxu0
      %v1079 = vpop.f32.mrf.mxu0
      %1080 = vdwg.mxu0
      %1081 = vrot.lane.b32.xlu0 %v844, 112
      %v1082 = vpop.permute.xlu0 %1081
      %1084 = vrot.lane.b32.xlu0 %v1008, 16
      %v1085 = vpop.permute.xlu0 %1084
      %v1087 = vsel %vm219, %v1076, %v1082
      %vm1088 = vcmask 392192
      %v1089 = vsel %vm1088, %v1087, %v1085
      %vm1090 = vcmask 654336
      %v1091 = vsel %vm1090, %v1089, 0.0
      %1092 = vst [vmem:[%s192] sm:$0x3] %v1091
      %p1093 = scmp.lt.s32.totalorder %s15, 3
      %s1094 = scalar_select %p1093, %s15, 3
      %s1095 = smul.addr %s1094, 2
      %s1096 = scalar_lea.vmem %s4, %s1095
      // Predicated region
      $region41: #{_forward_seq.1} parent=35 // pred_check
        %p1097 = pneg %p122
      $region42: #{_forward_seq.1} parent=35 // pred_check_branch
        %1099 = sbr.rel (%p1097) target = $region44
      $region43: #{_forward_seq.1} parent=35 // pred_region
        _
      $region44: #{_forward_seq.1} parent=35 // pred_fallthru
        _
    $region36: #{_forward_seq.1} parent=5 // pred_fallthru
      _
    %p1100 = scmp.le.s32.totalorder 2, %s10
    // Predicated region
    $region45: #{_forward_seq.1} parent=5 // pred_check
      %p1101 = pneg %p1100
    $region46: #{_forward_seq.1} parent=5 // pred_check_branch
      %1103 = sbr.rel (%p1101) target = $region48
    $region47: #{_forward_seq.1} parent=5 // pred_region
      %s1104 = ssub.s32 %s10, 2
      // Predicated region
      $region49: #{_forward_seq.1} parent=47 // pred_check
        %p1105 = pneg %p128
      $region50: #{_forward_seq.1} parent=47 // pred_check_branch
        %1107 = sbr.rel (%p1105) target = $region52
      $region51: #{_forward_seq.1} parent=47 // pred_region
        %p1108 = scmp.lt.s32.totalorder %s16, 3
        %s1109 = scalar_select %p1108, %s16, 3
        %s1110 = smul.addr %s1109, 2
        %s1111 = scalar_lea.vmem %s4, %s1110
      $region52: #{_forward_seq.1} parent=47 // pred_fallthru
        _
    $region48: #{_forward_seq.1} parent=5 // pred_fallthru
      _
  $region6: #{_forward_seq.1} parent=0 // loop_footer
    %s14 = sadd.s32 1, %s10
  $region7: #{_forward_seq.1} parent=0 // loop_footer_branch
    %9 = sbr.rel target = $region3
  $region8: #{_forward_seq.1} parent=0 // loop_exit
    _

</llo_original>
